<compile_context>
chip_gen: v7x
topology: tpu7x:2x2x1
jax: 0.10.0
libtpu: 0.0.40
codegen_flags: <defaults>
</compile_context>

<pallas_src>
import functools

import jax
import jax.numpy as jnp
from jax.experimental import pallas as pl
from jax.experimental.pallas import tpu as pltpu

KS = (3, 5, 7)        # kernel sizes of the three Separable_Conv branches
DILS = (1, 2, 4, 5)   # dilations inside each Separable_Conv
EPS = 1e-5


def _unique_offsets():
    offs = set()
    for k in KS:
        half = (k - 1) // 2
        for d in DILS:
            for j in range(k):
                offs.add((j - half) * d)
    return tuple(sorted(offs))


OFFSETS = _unique_offsets()   # 21 unique taps (the 60 (k,d,j) taps deduplicate to these)


# ----------------------------- Pallas kernel ------------------------------ #
def _msd_kernel(x_ref, w_cu_ref, b_cu_ref, w_agg_ref, b_agg_ref,
                w_c_ref, b_c_ref, g1_ref, be1_ref,
                w_rc_ref, b_rc_ref, g2_ref, be2_ref,
                o_ref, *, T, n_valid, offsets):
    Cin, L = x_ref.shape
    OC = o_ref.shape[0]

    xb = x_ref[...].astype(jnp.bfloat16)                               # (Cin, L)

    # Conv_Unit.conv (1x1, Cin -> Cin), all batches at once.
    x1 = jnp.dot(w_cu_ref[...], xb,
                 preferred_element_type=jnp.float32) + b_cu_ref[...]   # (Cin, L) f32

    # Unique-offset shifted copies of x1 with exact zero "same"-padding semantics.
    # Lane l = b*T + t; a tap at offset o is valid iff 0 <= t + o < T, which also keeps
    # it inside the same batch segment, so rolling across the whole lane axis is safe.
    tmod = jax.lax.broadcasted_iota(jnp.int32, (Cin, L), 1) % T
    pieces = []
    for o in offsets:
        if o == 0:
            pieces.append(x1)
        else:
            rolled = pltpu.roll(x1, (-o) % L, axis=1)      # rolled[:, l] = x1[:, l + o]
            valid = jnp.logical_and(tmod + o >= 0, tmod + o < T)
            pieces.append(jnp.where(valid, rolled, 0.0))
    stacked = jnp.concatenate(pieces, axis=0).astype(jnp.bfloat16)     # (n_off*Cin, L)

    # All 12 depthwise dilated convs + their pointwise 1x1 convs, fused into ONE matmul.
    out1 = jnp.dot(w_agg_ref[...], stacked,
                   preferred_element_type=jnp.float32) + b_agg_ref[...]    # (OC/2, L)
    # MSD_Block.conv (1x1 on out1); cat([out1, out2]) along channels.
    out2 = jnp.dot(w_c_ref[...], out1.astype(jnp.bfloat16),
                   preferred_element_type=jnp.float32) + b_c_ref[...]      # (OC/2, L)
    left = jnp.concatenate([out1, out2], axis=0)                           # (OC, L)
    # Residual_Connection 1x1 conv.
    right = jnp.dot(w_rc_ref[...], xb,
                    preferred_element_type=jnp.float32) + b_rc_ref[...]    # (OC, L)

    # BatchNorm1d, training-mode batch statistics over (B, T) == first n_valid lanes.
    lane = jax.lax.broadcasted_iota(jnp.int32, (OC, L), 1)
    vmask = (lane < n_valid).astype(jnp.float32)
    inv_n = 1.0 / float(n_valid)

    def bn_scale_bias(z, g, be):
        mean = jnp.sum(z * vmask, axis=1, keepdims=True) * inv_n
        cent = (z - mean) * vmask
        var = jnp.sum(cent * cent, axis=1, keepdims=True) * inv_n   # biased, centered
        scale = g * jax.lax.rsqrt(var + EPS)
        return scale, be - mean * scale

    a_l, c_l = bn_scale_bias(left, g1_ref[...], be1_ref[...])
    a_r, c_r = bn_scale_bias(right, g2_ref[...], be2_ref[...])
    o_ref[...] = (jnp.maximum(left * a_l + c_l, 0.0)
                  + right * a_r + c_r).astype(o_ref.dtype)


# ------------------------------- glue (JAX) -------------------------------- #
def init_params(key, in_channels, out_channels):
    """Raw PyTorch-style parameters (also used by the pure-JAX reference)."""
    oc2 = out_channels // 2
    oc6 = oc2 // 3            # Separable_Conv out_channels
    oc24 = oc6 // 4           # per-dilation pointwise out channels
    assert 3 * oc6 == oc2 and 4 * oc24 == oc6, "out_channels must be divisible by 24"

    def u(k, shape, fan_in):
        b = 1.0 / (fan_in ** 0.5)
        return jax.random.uniform(k, shape, jnp.float32, -b, b)

    keys = iter(jax.random.split(key, 128))
    p = {}
    # Conv_Unit.conv (1x1, in->in)
    p["w_cu"] = u(next(keys), (in_channels, in_channels), in_channels)
    p["b_cu"] = u(next(keys), (in_channels, 1), in_channels)
    for k in KS:
        # depthwise dilated convs (groups=in_channels): weight (Cin, k), bias (Cin, 1)
        p[f"dw_w{k}"] = jnp.stack([u(next(keys), (in_channels, k), k) for _ in DILS], 0)
        p[f"dw_b{k}"] = jnp.stack([u(next(keys), (in_channels, 1), k) for _ in DILS], 0)
        # pointwise 1x1 convs (in -> oc24)
        p[f"pw_w{k}"] = jnp.stack(
            [u(next(keys), (oc24, in_channels), in_channels) for _ in DILS], 0)
        p[f"pw_b{k}"] = jnp.stack(
            [u(next(keys), (oc24, 1), in_channels) for _ in DILS], 0)
    # MSD_Block.conv (1x1 on out1)
    p["w_c"] = u(next(keys), (oc2, oc2), oc2)
    p["b_c"] = u(next(keys), (oc2, 1), oc2)
    # BatchNorm affine (PyTorch init: weight=1, bias=0)
    p["g1"] = jnp.ones((out_channels, 1), jnp.float32)
    p["be1"] = jnp.zeros((out_channels, 1), jnp.float32)
    # Residual_Connection: 1x1 conv + BatchNorm
    p["w_rc"] = u(next(keys), (out_channels, in_channels), in_channels)
    p["b_rc"] = u(next(keys), (out_channels, 1), in_channels)
    p["g2"] = jnp.ones((out_channels, 1), jnp.float32)
    p["be2"] = jnp.zeros((out_channels, 1), jnp.float32)
    return p


def fuse_params(p, in_channels, out_channels):
    """Fold depthwise-dilated + pointwise weights into one aggregated matmul weight."""
    Cin = in_channels
    oc2 = out_channels // 2
    oc24 = oc2 // 12
    idx = {o: i for i, o in enumerate(OFFSETS)}
    w_agg = jnp.zeros((oc2, len(OFFSETS) * Cin), jnp.float32)
    b_agg = jnp.zeros((oc2, 1), jnp.float32)
    blk = 0
    for k in KS:
        half = (k - 1) // 2
        for di, _d in enumerate(DILS):
            d = DILS[di]
            dw = p[f"dw_w{k}"][di]          # (Cin, k)
            db = p[f"dw_b{k}"][di]          # (Cin, 1)
            wp = p[f"pw_w{k}"][di]          # (oc24, Cin)
            bp = p[f"pw_b{k}"][di]          # (oc24, 1)
            r0 = blk * oc24
            for j in range(k):
                o = (j - half) * d
                c0 = idx[o] * Cin
                w_agg = w_agg.at[r0:r0 + oc24, c0:c0 + Cin].add(wp * dw[:, j][None, :])
            b_agg = b_agg.at[r0:r0 + oc24].add(wp @ db + bp)
            blk += 1
    bf = jnp.bfloat16
    return {
        "w_cu": p["w_cu"].astype(bf), "b_cu": p["b_cu"],
        "w_agg": w_agg.astype(bf), "b_agg": b_agg,
        "w_c": p["w_c"].astype(bf), "b_c": p["b_c"],
        "g1": p["g1"], "be1": p["be1"],
        "w_rc": p["w_rc"].astype(bf), "b_rc": p["b_rc"],
        "g2": p["g2"], "be2": p["be2"],
    }


@jax.jit
def msd_block(x, kp):
    B, Cin, T = x.shape
    OC = kp["g1"].shape[0]
    oc2 = OC // 2
    n_off = len(OFFSETS)
    L = B * T
    Lp = -(-L // 128) * 128                      # lane-dense output (multiple of 128)

    x2d = jnp.transpose(x, (1, 0, 2)).reshape(Cin, L)
    x2d = jnp.pad(x2d, ((0, 0), (0, Lp - L)))

    kern = functools.partial(_msd_kernel, T=T, n_valid=L, offsets=OFFSETS)
    args = (x2d, kp["w_cu"], kp["b_cu"], kp["w_agg"], kp["b_agg"],
            kp["w_c"], kp["b_c"], kp["g1"], kp["be1"],
            kp["w_rc"], kp["b_rc"], kp["g2"], kp["be2"])

    mm_macs = Cin * Cin + oc2 * n_off * Cin + oc2 * oc2 + OC * Cin
    vmem_spec = pl.BlockSpec(memory_space=pltpu.MemorySpace.VMEM)
    out2d = pl.pallas_call(
        kern,
        out_shape=jax.ShapeDtypeStruct((OC, Lp), jnp.float32),
        in_specs=[vmem_spec] * len(args),
        out_specs=vmem_spec,
        compiler_params=pltpu.CompilerParams(vmem_limit_bytes=64 * 1024 * 1024),
        cost_estimate=pl.CostEstimate(
            flops=2 * Lp * mm_macs,
            transcendentals=2 * OC,
            bytes_accessed=4 * Lp * (Cin + OC) + 2 * mm_macs + 4 * (Cin + 2 * oc2 + 4 * OC)),
    )(*args)
    return out2d[:, :L].reshape(OC, B, T).transpose(1, 0, 2)


# -------------------- pure-JAX reference (module semantics) ---------------- #
def _shift_time(x, o):
    # y[..., t] = x[..., t + o], zero-padded (matches Conv1d "same" padding)
    if o == 0:
        return x
    z = x.shape[:-1]
    if o > 0:
        return jnp.concatenate([x[..., o:], jnp.zeros(z + (o,), x.dtype)], axis=-1)
    return jnp.concatenate([jnp.zeros(z + (-o,), x.dtype), x[..., :o]], axis=-1)


def _bn_train(x, g, b):
    mean = x.mean(axis=(0, 2), keepdims=True)
    var = ((x - mean) ** 2).mean(axis=(0, 2), keepdims=True)
    return (x - mean) * jax.lax.rsqrt(var + EPS) * g[None] + b[None]


def msd_block_ref(x, p):
    x1 = jnp.einsum("oi,bit->bot", p["w_cu"], x) + p["b_cu"][None]
    outs = []
    for k in KS:
        half = (k - 1) // 2
        for di, d in enumerate(DILS):
            dw, db = p[f"dw_w{k}"][di], p[f"dw_b{k}"][di]
            acc = jnp.zeros_like(x1)
            for j in range(k):
                acc = acc + dw[:, j][None, :, None] * _shift_time(x1, (j - half) * d)
            xd = acc + db[None]
            outs.append(jnp.einsum("oi,bit->bot", p[f"pw_w{k}"][di], xd)
                        + p[f"pw_b{k}"][di][None])
    out1 = jnp.concatenate(outs, axis=1)
    out2 = jnp.einsum("oi,bit->bot", p["w_c"], out1) + p["b_c"][None]
    left = jnp.maximum(_bn_train(jnp.concatenate([out1, out2], axis=1),
                                 p["g1"], p["be1"]), 0.0)
    rc = jnp.einsum("oi,bit->bot", p["w_rc"], x) + p["b_rc"][None]
    return left + _bn_train(rc, p["g2"], p["be2"])


if __name__ == "__main__":
    B, C_IN, T = 2, 8, 24
    OUT_CHANNELS = 48   # must be divisible by 24 (//2 //3 //4 in the module)

    key = jax.random.PRNGKey(0)
    kx, kparam = jax.random.split(key)
    x = jax.random.normal(kx, (B, C_IN, T), jnp.float32)
    params = init_params(kparam, C_IN, OUT_CHANNELS)
    kparams = fuse_params(params, C_IN, OUT_CHANNELS)

    out = msd_block(x, kparams)
    jax.block_until_ready(out)
    assert out.shape == (B, OUT_CHANNELS, T) and out.dtype == jnp.float32

    # Structural correctness check vs. f32 reference (loose tolerance: MXU runs in bf16).
    ref = msd_block_ref(x, params)
    max_err = float(jnp.max(jnp.abs(out - ref)))
    assert max_err < 0.25, f"max abs err vs reference = {max_err}"
    print("KERNEL_OK")
</pallas_src>

<mosaic_0001>
module attributes {stable_mosaic.version = 11 : i64} {
  func.func @_msd_kernel(%arg0: memref<8x128xf32, #tpu.memory_space<vmem>>, %arg1: memref<8x8xbf16, #tpu.memory_space<vmem>>, %arg2: memref<8x1xf32, #tpu.memory_space<vmem>>, %arg3: memref<24x168xbf16, #tpu.memory_space<vmem>>, %arg4: memref<24x1xf32, #tpu.memory_space<vmem>>, %arg5: memref<24x24xbf16, #tpu.memory_space<vmem>>, %arg6: memref<24x1xf32, #tpu.memory_space<vmem>>, %arg7: memref<48x1xf32, #tpu.memory_space<vmem>>, %arg8: memref<48x1xf32, #tpu.memory_space<vmem>>, %arg9: memref<48x8xbf16, #tpu.memory_space<vmem>>, %arg10: memref<48x1xf32, #tpu.memory_space<vmem>>, %arg11: memref<48x1xf32, #tpu.memory_space<vmem>>, %arg12: memref<48x1xf32, #tpu.memory_space<vmem>>, %arg13: memref<48x128xf32, #tpu.memory_space<vmem>>) attributes {dimension_semantics = [], scalar_prefetch = 0 : i64, scratch_operands = 0 : i64, tpu.core_type = #tpu.core_type<tc>} {
    %c0 = arith.constant 0 : index
    %c0_0 = arith.constant 0 : index
    %0 = vector.load %arg0[%c0, %c0_0] : memref<8x128xf32, #tpu.memory_space<vmem>>, vector<8x128xf32>
    %1 = arith.truncf %0 : vector<8x128xf32> to vector<8x128xbf16>
    %c0_1 = arith.constant 0 : index
    %c0_2 = arith.constant 0 : index
    %2 = vector.load %arg1[%c0_1, %c0_2] : memref<8x8xbf16, #tpu.memory_space<vmem>>, vector<8x8xbf16>
    %cst = arith.constant dense<0.000000e+00> : vector<8x128xf32>
    %3 = tpu.matmul %2, %1, %cst {dimension_numbers = #tpu.dot_dimension_numbers<[1], [0], [0], [1], [0, 0, 1, 1], [], []>} : vector<8x8xbf16>, vector<8x128xbf16>, vector<8x128xf32> -> vector<8x128xf32>
    %c0_3 = arith.constant 0 : index
    %c0_4 = arith.constant 0 : index
    %4 = vector.load %arg2[%c0_3, %c0_4] : memref<8x1xf32, #tpu.memory_space<vmem>>, vector<8x1xf32>
    %5 = vector.broadcast %4 : vector<8x1xf32> to vector<8x128xf32>
    %6 = arith.addf %3, %5 : vector<8x128xf32>
    %7 = tpu.iota {dimensions = array<i32: 1>} : vector<8x128xi32>
    %c24_i32 = arith.constant 24 : i32
    %c0_i32 = arith.constant 0 : i32
    %8 = arith.cmpi eq, %c24_i32, %c0_i32 : i32
    %c1_i32 = arith.constant 1 : i32
    %9 = arith.select %8, %c1_i32, %c24_i32 : i32
    %10 = vector.broadcast %9 : i32 to vector<8x128xi32>
    %11 = arith.remsi %7, %10 : vector<8x128xi32>
    %c0_i32_5 = arith.constant 0 : i32
    %12 = vector.broadcast %c0_i32_5 : i32 to vector<8x128xi32>
    %13 = arith.cmpi ne, %11, %12 : vector<8x128xi32>
    %c0_i32_6 = arith.constant 0 : i32
    %14 = vector.broadcast %c0_i32_6 : i32 to vector<8x128xi32>
    %15 = arith.cmpi slt, %11, %14 : vector<8x128xi32>
    %c0_i32_7 = arith.constant 0 : i32
    %16 = arith.cmpi slt, %9, %c0_i32_7 : i32
    %17 = vector.broadcast %16 : i1 to vector<8x128xi1>
    %18 = vector.broadcast %17 : vector<8x128xi1> to vector<8x128xi1>
    %19 = arith.xori %15, %18 : vector<8x128xi1>
    %20 = arith.andi %19, %13 : vector<8x128xi1>
    %21 = vector.broadcast %9 : i32 to vector<8x128xi32>
    %22 = arith.addi %11, %21 : vector<8x128xi32>
    %23 = arith.select %20, %22, %11 : vector<8x128xi1>, vector<8x128xi32>
    %c15_i32 = arith.constant 15 : i32
    %24 = tpu.dynamic_rotate %6 by %c15_i32 dim 1 : vector<8x128xf32>, i32 -> vector<8x128xf32>
    %c-15_i32 = arith.constant -15 : i32
    %25 = vector.broadcast %c-15_i32 : i32 to vector<8x128xi32>
    %26 = arith.addi %23, %25 : vector<8x128xi32>
    %c0_i32_8 = arith.constant 0 : i32
    %27 = vector.broadcast %c0_i32_8 : i32 to vector<8x128xi32>
    %28 = arith.cmpi sge, %26, %27 : vector<8x128xi32>
    %c-15_i32_9 = arith.constant -15 : i32
    %29 = vector.broadcast %c-15_i32_9 : i32 to vector<8x128xi32>
    %30 = arith.addi %23, %29 : vector<8x128xi32>
    %c24_i32_10 = arith.constant 24 : i32
    %31 = vector.broadcast %c24_i32_10 : i32 to vector<8x128xi32>
    %32 = arith.cmpi slt, %30, %31 : vector<8x128xi32>
    %33 = arith.andi %28, %32 : vector<8x128xi1>
    %cst_11 = arith.constant 0.000000e+00 : f32
    %34 = vector.broadcast %cst_11 : f32 to vector<8x128xf32>
    %35 = arith.select %33, %24, %34 : vector<8x128xi1>, vector<8x128xf32>
    %c12_i32 = arith.constant 12 : i32
    %36 = tpu.dynamic_rotate %6 by %c12_i32 dim 1 : vector<8x128xf32>, i32 -> vector<8x128xf32>
    %c-12_i32 = arith.constant -12 : i32
    %37 = vector.broadcast %c-12_i32 : i32 to vector<8x128xi32>
    %38 = arith.addi %23, %37 : vector<8x128xi32>
    %c0_i32_12 = arith.constant 0 : i32
    %39 = vector.broadcast %c0_i32_12 : i32 to vector<8x128xi32>
    %40 = arith.cmpi sge, %38, %39 : vector<8x128xi32>
    %c-12_i32_13 = arith.constant -12 : i32
    %41 = vector.broadcast %c-12_i32_13 : i32 to vector<8x128xi32>
    %42 = arith.addi %23, %41 : vector<8x128xi32>
    %c24_i32_14 = arith.constant 24 : i32
    %43 = vector.broadcast %c24_i32_14 : i32 to vector<8x128xi32>
    %44 = arith.cmpi slt, %42, %43 : vector<8x128xi32>
    %45 = arith.andi %40, %44 : vector<8x128xi1>
    %cst_15 = arith.constant 0.000000e+00 : f32
    %46 = vector.broadcast %cst_15 : f32 to vector<8x128xf32>
    %47 = arith.select %45, %36, %46 : vector<8x128xi1>, vector<8x128xf32>
    %c10_i32 = arith.constant 10 : i32
    %48 = tpu.dynamic_rotate %6 by %c10_i32 dim 1 : vector<8x128xf32>, i32 -> vector<8x128xf32>
    %c-10_i32 = arith.constant -10 : i32
    %49 = vector.broadcast %c-10_i32 : i32 to vector<8x128xi32>
    %50 = arith.addi %23, %49 : vector<8x128xi32>
    %c0_i32_16 = arith.constant 0 : i32
    %51 = vector.broadcast %c0_i32_16 : i32 to vector<8x128xi32>
    %52 = arith.cmpi sge, %50, %51 : vector<8x128xi32>
    %c-10_i32_17 = arith.constant -10 : i32
    %53 = vector.broadcast %c-10_i32_17 : i32 to vector<8x128xi32>
    %54 = arith.addi %23, %53 : vector<8x128xi32>
    %c24_i32_18 = arith.constant 24 : i32
    %55 = vector.broadcast %c24_i32_18 : i32 to vector<8x128xi32>
    %56 = arith.cmpi slt, %54, %55 : vector<8x128xi32>
    %57 = arith.andi %52, %56 : vector<8x128xi1>
    %cst_19 = arith.constant 0.000000e+00 : f32
    %58 = vector.broadcast %cst_19 : f32 to vector<8x128xf32>
    %59 = arith.select %57, %48, %58 : vector<8x128xi1>, vector<8x128xf32>
    %c8_i32 = arith.constant 8 : i32
    %60 = tpu.dynamic_rotate %6 by %c8_i32 dim 1 : vector<8x128xf32>, i32 -> vector<8x128xf32>
    %c-8_i32 = arith.constant -8 : i32
    %61 = vector.broadcast %c-8_i32 : i32 to vector<8x128xi32>
    %62 = arith.addi %23, %61 : vector<8x128xi32>
    %c0_i32_20 = arith.constant 0 : i32
    %63 = vector.broadcast %c0_i32_20 : i32 to vector<8x128xi32>
    %64 = arith.cmpi sge, %62, %63 : vector<8x128xi32>
    %c-8_i32_21 = arith.constant -8 : i32
    %65 = vector.broadcast %c-8_i32_21 : i32 to vector<8x128xi32>
    %66 = arith.addi %23, %65 : vector<8x128xi32>
    %c24_i32_22 = arith.constant 24 : i32
    %67 = vector.broadcast %c24_i32_22 : i32 to vector<8x128xi32>
    %68 = arith.cmpi slt, %66, %67 : vector<8x128xi32>
    %69 = arith.andi %64, %68 : vector<8x128xi1>
    %cst_23 = arith.constant 0.000000e+00 : f32
    %70 = vector.broadcast %cst_23 : f32 to vector<8x128xf32>
    %71 = arith.select %69, %60, %70 : vector<8x128xi1>, vector<8x128xf32>
    %c6_i32 = arith.constant 6 : i32
    %72 = tpu.dynamic_rotate %6 by %c6_i32 dim 1 : vector<8x128xf32>, i32 -> vector<8x128xf32>
    %c-6_i32 = arith.constant -6 : i32
    %73 = vector.broadcast %c-6_i32 : i32 to vector<8x128xi32>
    %74 = arith.addi %23, %73 : vector<8x128xi32>
    %c0_i32_24 = arith.constant 0 : i32
    %75 = vector.broadcast %c0_i32_24 : i32 to vector<8x128xi32>
    %76 = arith.cmpi sge, %74, %75 : vector<8x128xi32>
    %c-6_i32_25 = arith.constant -6 : i32
    %77 = vector.broadcast %c-6_i32_25 : i32 to vector<8x128xi32>
    %78 = arith.addi %23, %77 : vector<8x128xi32>
    %c24_i32_26 = arith.constant 24 : i32
    %79 = vector.broadcast %c24_i32_26 : i32 to vector<8x128xi32>
    %80 = arith.cmpi slt, %78, %79 : vector<8x128xi32>
    %81 = arith.andi %76, %80 : vector<8x128xi1>
    %cst_27 = arith.constant 0.000000e+00 : f32
    %82 = vector.broadcast %cst_27 : f32 to vector<8x128xf32>
    %83 = arith.select %81, %72, %82 : vector<8x128xi1>, vector<8x128xf32>
    %c5_i32 = arith.constant 5 : i32
    %84 = tpu.dynamic_rotate %6 by %c5_i32 dim 1 : vector<8x128xf32>, i32 -> vector<8x128xf32>
    %c-5_i32 = arith.constant -5 : i32
    %85 = vector.broadcast %c-5_i32 : i32 to vector<8x128xi32>
    %86 = arith.addi %23, %85 : vector<8x128xi32>
    %c0_i32_28 = arith.constant 0 : i32
    %87 = vector.broadcast %c0_i32_28 : i32 to vector<8x128xi32>
    %88 = arith.cmpi sge, %86, %87 : vector<8x128xi32>
    %c-5_i32_29 = arith.constant -5 : i32
    %89 = vector.broadcast %c-5_i32_29 : i32 to vector<8x128xi32>
    %90 = arith.addi %23, %89 : vector<8x128xi32>
    %c24_i32_30 = arith.constant 24 : i32
    %91 = vector.broadcast %c24_i32_30 : i32 to vector<8x128xi32>
    %92 = arith.cmpi slt, %90, %91 : vector<8x128xi32>
    %93 = arith.andi %88, %92 : vector<8x128xi1>
    %cst_31 = arith.constant 0.000000e+00 : f32
    %94 = vector.broadcast %cst_31 : f32 to vector<8x128xf32>
    %95 = arith.select %93, %84, %94 : vector<8x128xi1>, vector<8x128xf32>
    %c4_i32 = arith.constant 4 : i32
    %96 = tpu.dynamic_rotate %6 by %c4_i32 dim 1 : vector<8x128xf32>, i32 -> vector<8x128xf32>
    %c-4_i32 = arith.constant -4 : i32
    %97 = vector.broadcast %c-4_i32 : i32 to vector<8x128xi32>
    %98 = arith.addi %23, %97 : vector<8x128xi32>
    %c0_i32_32 = arith.constant 0 : i32
    %99 = vector.broadcast %c0_i32_32 : i32 to vector<8x128xi32>
    %100 = arith.cmpi sge, %98, %99 : vector<8x128xi32>
    %c-4_i32_33 = arith.constant -4 : i32
    %101 = vector.broadcast %c-4_i32_33 : i32 to vector<8x128xi32>
    %102 = arith.addi %23, %101 : vector<8x128xi32>
    %c24_i32_34 = arith.constant 24 : i32
    %103 = vector.broadcast %c24_i32_34 : i32 to vector<8x128xi32>
    %104 = arith.cmpi slt, %102, %103 : vector<8x128xi32>
    %105 = arith.andi %100, %104 : vector<8x128xi1>
    %cst_35 = arith.constant 0.000000e+00 : f32
    %106 = vector.broadcast %cst_35 : f32 to vector<8x128xf32>
    %107 = arith.select %105, %96, %106 : vector<8x128xi1>, vector<8x128xf32>
    %c3_i32 = arith.constant 3 : i32
    %108 = tpu.dynamic_rotate %6 by %c3_i32 dim 1 : vector<8x128xf32>, i32 -> vector<8x128xf32>
    %c-3_i32 = arith.constant -3 : i32
    %109 = vector.broadcast %c-3_i32 : i32 to vector<8x128xi32>
    %110 = arith.addi %23, %109 : vector<8x128xi32>
    %c0_i32_36 = arith.constant 0 : i32
    %111 = vector.broadcast %c0_i32_36 : i32 to vector<8x128xi32>
    %112 = arith.cmpi sge, %110, %111 : vector<8x128xi32>
    %c-3_i32_37 = arith.constant -3 : i32
    %113 = vector.broadcast %c-3_i32_37 : i32 to vector<8x128xi32>
    %114 = arith.addi %23, %113 : vector<8x128xi32>
    %c24_i32_38 = arith.constant 24 : i32
    %115 = vector.broadcast %c24_i32_38 : i32 to vector<8x128xi32>
    %116 = arith.cmpi slt, %114, %115 : vector<8x128xi32>
    %117 = arith.andi %112, %116 : vector<8x128xi1>
    %cst_39 = arith.constant 0.000000e+00 : f32
    %118 = vector.broadcast %cst_39 : f32 to vector<8x128xf32>
    %119 = arith.select %117, %108, %118 : vector<8x128xi1>, vector<8x128xf32>
    %c2_i32 = arith.constant 2 : i32
    %120 = tpu.dynamic_rotate %6 by %c2_i32 dim 1 : vector<8x128xf32>, i32 -> vector<8x128xf32>
    %c-2_i32 = arith.constant -2 : i32
    %121 = vector.broadcast %c-2_i32 : i32 to vector<8x128xi32>
    %122 = arith.addi %23, %121 : vector<8x128xi32>
    %c0_i32_40 = arith.constant 0 : i32
    %123 = vector.broadcast %c0_i32_40 : i32 to vector<8x128xi32>
    %124 = arith.cmpi sge, %122, %123 : vector<8x128xi32>
    %c-2_i32_41 = arith.constant -2 : i32
    %125 = vector.broadcast %c-2_i32_41 : i32 to vector<8x128xi32>
    %126 = arith.addi %23, %125 : vector<8x128xi32>
    %c24_i32_42 = arith.constant 24 : i32
    %127 = vector.broadcast %c24_i32_42 : i32 to vector<8x128xi32>
    %128 = arith.cmpi slt, %126, %127 : vector<8x128xi32>
    %129 = arith.andi %124, %128 : vector<8x128xi1>
    %cst_43 = arith.constant 0.000000e+00 : f32
    %130 = vector.broadcast %cst_43 : f32 to vector<8x128xf32>
    %131 = arith.select %129, %120, %130 : vector<8x128xi1>, vector<8x128xf32>
    %c1_i32_44 = arith.constant 1 : i32
    %132 = tpu.dynamic_rotate %6 by %c1_i32_44 dim 1 : vector<8x128xf32>, i32 -> vector<8x128xf32>
    %c-1_i32 = arith.constant -1 : i32
    %133 = vector.broadcast %c-1_i32 : i32 to vector<8x128xi32>
    %134 = arith.addi %23, %133 : vector<8x128xi32>
    %c0_i32_45 = arith.constant 0 : i32
    %135 = vector.broadcast %c0_i32_45 : i32 to vector<8x128xi32>
    %136 = arith.cmpi sge, %134, %135 : vector<8x128xi32>
    %c-1_i32_46 = arith.constant -1 : i32
    %137 = vector.broadcast %c-1_i32_46 : i32 to vector<8x128xi32>
    %138 = arith.addi %23, %137 : vector<8x128xi32>
    %c24_i32_47 = arith.constant 24 : i32
    %139 = vector.broadcast %c24_i32_47 : i32 to vector<8x128xi32>
    %140 = arith.cmpi slt, %138, %139 : vector<8x128xi32>
    %141 = arith.andi %136, %140 : vector<8x128xi1>
    %cst_48 = arith.constant 0.000000e+00 : f32
    %142 = vector.broadcast %cst_48 : f32 to vector<8x128xf32>
    %143 = arith.select %141, %132, %142 : vector<8x128xi1>, vector<8x128xf32>
    %c127_i32 = arith.constant 127 : i32
    %144 = tpu.dynamic_rotate %6 by %c127_i32 dim 1 : vector<8x128xf32>, i32 -> vector<8x128xf32>
    %c1_i32_49 = arith.constant 1 : i32
    %145 = vector.broadcast %c1_i32_49 : i32 to vector<8x128xi32>
    %146 = arith.addi %23, %145 : vector<8x128xi32>
    %c0_i32_50 = arith.constant 0 : i32
    %147 = vector.broadcast %c0_i32_50 : i32 to vector<8x128xi32>
    %148 = arith.cmpi sge, %146, %147 : vector<8x128xi32>
    %c1_i32_51 = arith.constant 1 : i32
    %149 = vector.broadcast %c1_i32_51 : i32 to vector<8x128xi32>
    %150 = arith.addi %23, %149 : vector<8x128xi32>
    %c24_i32_52 = arith.constant 24 : i32
    %151 = vector.broadcast %c24_i32_52 : i32 to vector<8x128xi32>
    %152 = arith.cmpi slt, %150, %151 : vector<8x128xi32>
    %153 = arith.andi %148, %152 : vector<8x128xi1>
    %cst_53 = arith.constant 0.000000e+00 : f32
    %154 = vector.broadcast %cst_53 : f32 to vector<8x128xf32>
    %155 = arith.select %153, %144, %154 : vector<8x128xi1>, vector<8x128xf32>
    %c126_i32 = arith.constant 126 : i32
    %156 = tpu.dynamic_rotate %6 by %c126_i32 dim 1 : vector<8x128xf32>, i32 -> vector<8x128xf32>
    %c2_i32_54 = arith.constant 2 : i32
    %157 = vector.broadcast %c2_i32_54 : i32 to vector<8x128xi32>
    %158 = arith.addi %23, %157 : vector<8x128xi32>
    %c0_i32_55 = arith.constant 0 : i32
    %159 = vector.broadcast %c0_i32_55 : i32 to vector<8x128xi32>
    %160 = arith.cmpi sge, %158, %159 : vector<8x128xi32>
    %c2_i32_56 = arith.constant 2 : i32
    %161 = vector.broadcast %c2_i32_56 : i32 to vector<8x128xi32>
    %162 = arith.addi %23, %161 : vector<8x128xi32>
    %c24_i32_57 = arith.constant 24 : i32
    %163 = vector.broadcast %c24_i32_57 : i32 to vector<8x128xi32>
    %164 = arith.cmpi slt, %162, %163 : vector<8x128xi32>
    %165 = arith.andi %160, %164 : vector<8x128xi1>
    %cst_58 = arith.constant 0.000000e+00 : f32
    %166 = vector.broadcast %cst_58 : f32 to vector<8x128xf32>
    %167 = arith.select %165, %156, %166 : vector<8x128xi1>, vector<8x128xf32>
    %c125_i32 = arith.constant 125 : i32
    %168 = tpu.dynamic_rotate %6 by %c125_i32 dim 1 : vector<8x128xf32>, i32 -> vector<8x128xf32>
    %c3_i32_59 = arith.constant 3 : i32
    %169 = vector.broadcast %c3_i32_59 : i32 to vector<8x128xi32>
    %170 = arith.addi %23, %169 : vector<8x128xi32>
    %c0_i32_60 = arith.constant 0 : i32
    %171 = vector.broadcast %c0_i32_60 : i32 to vector<8x128xi32>
    %172 = arith.cmpi sge, %170, %171 : vector<8x128xi32>
    %c3_i32_61 = arith.constant 3 : i32
    %173 = vector.broadcast %c3_i32_61 : i32 to vector<8x128xi32>
    %174 = arith.addi %23, %173 : vector<8x128xi32>
    %c24_i32_62 = arith.constant 24 : i32
    %175 = vector.broadcast %c24_i32_62 : i32 to vector<8x128xi32>
    %176 = arith.cmpi slt, %174, %175 : vector<8x128xi32>
    %177 = arith.andi %172, %176 : vector<8x128xi1>
    %cst_63 = arith.constant 0.000000e+00 : f32
    %178 = vector.broadcast %cst_63 : f32 to vector<8x128xf32>
    %179 = arith.select %177, %168, %178 : vector<8x128xi1>, vector<8x128xf32>
    %c124_i32 = arith.constant 124 : i32
    %180 = tpu.dynamic_rotate %6 by %c124_i32 dim 1 : vector<8x128xf32>, i32 -> vector<8x128xf32>
    %c4_i32_64 = arith.constant 4 : i32
    %181 = vector.broadcast %c4_i32_64 : i32 to vector<8x128xi32>
    %182 = arith.addi %23, %181 : vector<8x128xi32>
    %c0_i32_65 = arith.constant 0 : i32
    %183 = vector.broadcast %c0_i32_65 : i32 to vector<8x128xi32>
    %184 = arith.cmpi sge, %182, %183 : vector<8x128xi32>
    %c4_i32_66 = arith.constant 4 : i32
    %185 = vector.broadcast %c4_i32_66 : i32 to vector<8x128xi32>
    %186 = arith.addi %23, %185 : vector<8x128xi32>
    %c24_i32_67 = arith.constant 24 : i32
    %187 = vector.broadcast %c24_i32_67 : i32 to vector<8x128xi32>
    %188 = arith.cmpi slt, %186, %187 : vector<8x128xi32>
    %189 = arith.andi %184, %188 : vector<8x128xi1>
    %cst_68 = arith.constant 0.000000e+00 : f32
    %190 = vector.broadcast %cst_68 : f32 to vector<8x128xf32>
    %191 = arith.select %189, %180, %190 : vector<8x128xi1>, vector<8x128xf32>
    %c123_i32 = arith.constant 123 : i32
    %192 = tpu.dynamic_rotate %6 by %c123_i32 dim 1 : vector<8x128xf32>, i32 -> vector<8x128xf32>
    %c5_i32_69 = arith.constant 5 : i32
    %193 = vector.broadcast %c5_i32_69 : i32 to vector<8x128xi32>
    %194 = arith.addi %23, %193 : vector<8x128xi32>
    %c0_i32_70 = arith.constant 0 : i32
    %195 = vector.broadcast %c0_i32_70 : i32 to vector<8x128xi32>
    %196 = arith.cmpi sge, %194, %195 : vector<8x128xi32>
    %c5_i32_71 = arith.constant 5 : i32
    %197 = vector.broadcast %c5_i32_71 : i32 to vector<8x128xi32>
    %198 = arith.addi %23, %197 : vector<8x128xi32>
    %c24_i32_72 = arith.constant 24 : i32
    %199 = vector.broadcast %c24_i32_72 : i32 to vector<8x128xi32>
    %200 = arith.cmpi slt, %198, %199 : vector<8x128xi32>
    %201 = arith.andi %196, %200 : vector<8x128xi1>
    %cst_73 = arith.constant 0.000000e+00 : f32
    %202 = vector.broadcast %cst_73 : f32 to vector<8x128xf32>
    %203 = arith.select %201, %192, %202 : vector<8x128xi1>, vector<8x128xf32>
    %c122_i32 = arith.constant 122 : i32
    %204 = tpu.dynamic_rotate %6 by %c122_i32 dim 1 : vector<8x128xf32>, i32 -> vector<8x128xf32>
    %c6_i32_74 = arith.constant 6 : i32
    %205 = vector.broadcast %c6_i32_74 : i32 to vector<8x128xi32>
    %206 = arith.addi %23, %205 : vector<8x128xi32>
    %c0_i32_75 = arith.constant 0 : i32
    %207 = vector.broadcast %c0_i32_75 : i32 to vector<8x128xi32>
    %208 = arith.cmpi sge, %206, %207 : vector<8x128xi32>
    %c6_i32_76 = arith.constant 6 : i32
    %209 = vector.broadcast %c6_i32_76 : i32 to vector<8x128xi32>
    %210 = arith.addi %23, %209 : vector<8x128xi32>
    %c24_i32_77 = arith.constant 24 : i32
    %211 = vector.broadcast %c24_i32_77 : i32 to vector<8x128xi32>
    %212 = arith.cmpi slt, %210, %211 : vector<8x128xi32>
    %213 = arith.andi %208, %212 : vector<8x128xi1>
    %cst_78 = arith.constant 0.000000e+00 : f32
    %214 = vector.broadcast %cst_78 : f32 to vector<8x128xf32>
    %215 = arith.select %213, %204, %214 : vector<8x128xi1>, vector<8x128xf32>
    %c120_i32 = arith.constant 120 : i32
    %216 = tpu.dynamic_rotate %6 by %c120_i32 dim 1 : vector<8x128xf32>, i32 -> vector<8x128xf32>
    %c8_i32_79 = arith.constant 8 : i32
    %217 = vector.broadcast %c8_i32_79 : i32 to vector<8x128xi32>
    %218 = arith.addi %23, %217 : vector<8x128xi32>
    %c0_i32_80 = arith.constant 0 : i32
    %219 = vector.broadcast %c0_i32_80 : i32 to vector<8x128xi32>
    %220 = arith.cmpi sge, %218, %219 : vector<8x128xi32>
    %c8_i32_81 = arith.constant 8 : i32
    %221 = vector.broadcast %c8_i32_81 : i32 to vector<8x128xi32>
    %222 = arith.addi %23, %221 : vector<8x128xi32>
    %c24_i32_82 = arith.constant 24 : i32
    %223 = vector.broadcast %c24_i32_82 : i32 to vector<8x128xi32>
    %224 = arith.cmpi slt, %222, %223 : vector<8x128xi32>
    %225 = arith.andi %220, %224 : vector<8x128xi1>
    %cst_83 = arith.constant 0.000000e+00 : f32
    %226 = vector.broadcast %cst_83 : f32 to vector<8x128xf32>
    %227 = arith.select %225, %216, %226 : vector<8x128xi1>, vector<8x128xf32>
    %c118_i32 = arith.constant 118 : i32
    %228 = tpu.dynamic_rotate %6 by %c118_i32 dim 1 : vector<8x128xf32>, i32 -> vector<8x128xf32>
    %c10_i32_84 = arith.constant 10 : i32
    %229 = vector.broadcast %c10_i32_84 : i32 to vector<8x128xi32>
    %230 = arith.addi %23, %229 : vector<8x128xi32>
    %c0_i32_85 = arith.constant 0 : i32
    %231 = vector.broadcast %c0_i32_85 : i32 to vector<8x128xi32>
    %232 = arith.cmpi sge, %230, %231 : vector<8x128xi32>
    %c10_i32_86 = arith.constant 10 : i32
    %233 = vector.broadcast %c10_i32_86 : i32 to vector<8x128xi32>
    %234 = arith.addi %23, %233 : vector<8x128xi32>
    %c24_i32_87 = arith.constant 24 : i32
    %235 = vector.broadcast %c24_i32_87 : i32 to vector<8x128xi32>
    %236 = arith.cmpi slt, %234, %235 : vector<8x128xi32>
    %237 = arith.andi %232, %236 : vector<8x128xi1>
    %cst_88 = arith.constant 0.000000e+00 : f32
    %238 = vector.broadcast %cst_88 : f32 to vector<8x128xf32>
    %239 = arith.select %237, %228, %238 : vector<8x128xi1>, vector<8x128xf32>
    %c116_i32 = arith.constant 116 : i32
    %240 = tpu.dynamic_rotate %6 by %c116_i32 dim 1 : vector<8x128xf32>, i32 -> vector<8x128xf32>
    %c12_i32_89 = arith.constant 12 : i32
    %241 = vector.broadcast %c12_i32_89 : i32 to vector<8x128xi32>
    %242 = arith.addi %23, %241 : vector<8x128xi32>
    %c0_i32_90 = arith.constant 0 : i32
    %243 = vector.broadcast %c0_i32_90 : i32 to vector<8x128xi32>
    %244 = arith.cmpi sge, %242, %243 : vector<8x128xi32>
    %c12_i32_91 = arith.constant 12 : i32
    %245 = vector.broadcast %c12_i32_91 : i32 to vector<8x128xi32>
    %246 = arith.addi %23, %245 : vector<8x128xi32>
    %c24_i32_92 = arith.constant 24 : i32
    %247 = vector.broadcast %c24_i32_92 : i32 to vector<8x128xi32>
    %248 = arith.cmpi slt, %246, %247 : vector<8x128xi32>
    %249 = arith.andi %244, %248 : vector<8x128xi1>
    %cst_93 = arith.constant 0.000000e+00 : f32
    %250 = vector.broadcast %cst_93 : f32 to vector<8x128xf32>
    %251 = arith.select %249, %240, %250 : vector<8x128xi1>, vector<8x128xf32>
    %c113_i32 = arith.constant 113 : i32
    %252 = tpu.dynamic_rotate %6 by %c113_i32 dim 1 : vector<8x128xf32>, i32 -> vector<8x128xf32>
    %c15_i32_94 = arith.constant 15 : i32
    %253 = vector.broadcast %c15_i32_94 : i32 to vector<8x128xi32>
    %254 = arith.addi %23, %253 : vector<8x128xi32>
    %c0_i32_95 = arith.constant 0 : i32
    %255 = vector.broadcast %c0_i32_95 : i32 to vector<8x128xi32>
    %256 = arith.cmpi sge, %254, %255 : vector<8x128xi32>
    %c15_i32_96 = arith.constant 15 : i32
    %257 = vector.broadcast %c15_i32_96 : i32 to vector<8x128xi32>
    %258 = arith.addi %23, %257 : vector<8x128xi32>
    %c24_i32_97 = arith.constant 24 : i32
    %259 = vector.broadcast %c24_i32_97 : i32 to vector<8x128xi32>
    %260 = arith.cmpi slt, %258, %259 : vector<8x128xi32>
    %261 = arith.andi %256, %260 : vector<8x128xi1>
    %cst_98 = arith.constant 0.000000e+00 : f32
    %262 = vector.broadcast %cst_98 : f32 to vector<8x128xf32>
    %263 = arith.select %261, %252, %262 : vector<8x128xi1>, vector<8x128xf32>
    %264 = tpu.concatenate %35, %47, %59, %71, %83, %95, %107, %119, %131, %143, %6, %155, %167, %179, %191, %203 in 0 : vector<8x128xf32>, vector<8x128xf32>, vector<8x128xf32>, vector<8x128xf32>, vector<8x128xf32>, vector<8x128xf32>, vector<8x128xf32>, vector<8x128xf32>, vector<8x128xf32>, vector<8x128xf32>, vector<8x128xf32>, vector<8x128xf32>, vector<8x128xf32>, vector<8x128xf32>, vector<8x128xf32>, vector<8x128xf32> -> vector<128x128xf32>
    %265 = tpu.concatenate %215, %227, %239, %251, %263 in 0 : vector<8x128xf32>, vector<8x128xf32>, vector<8x128xf32>, vector<8x128xf32>, vector<8x128xf32> -> vector<40x128xf32>
    %266 = tpu.concatenate %264, %265 in 0 : vector<128x128xf32>, vector<40x128xf32> -> vector<168x128xf32>
    %267 = arith.truncf %266 : vector<168x128xf32> to vector<168x128xbf16>
    %c0_99 = arith.constant 0 : index
    %c0_100 = arith.constant 0 : index
    %268 = vector.load %arg3[%c0_99, %c0_100] : memref<24x168xbf16, #tpu.memory_space<vmem>>, vector<24x168xbf16>
    %cst_101 = arith.constant dense<0.000000e+00> : vector<24x128xf32>
    %269 = tpu.matmul %268, %267, %cst_101 {dimension_numbers = #tpu.dot_dimension_numbers<[1], [0], [0], [1], [0, 0, 1, 1], [], []>} : vector<24x168xbf16>, vector<168x128xbf16>, vector<24x128xf32> -> vector<24x128xf32>
    %c0_102 = arith.constant 0 : index
    %c0_103 = arith.constant 0 : index
    %270 = vector.load %arg4[%c0_102, %c0_103] : memref<24x1xf32, #tpu.memory_space<vmem>>, vector<24x1xf32>
    %271 = vector.broadcast %270 : vector<24x1xf32> to vector<24x128xf32>
    %272 = arith.addf %269, %271 : vector<24x128xf32>
    %c0_104 = arith.constant 0 : index
    %c0_105 = arith.constant 0 : index
    %273 = vector.load %arg5[%c0_104, %c0_105] : memref<24x24xbf16, #tpu.memory_space<vmem>>, vector<24x24xbf16>
    %274 = arith.truncf %272 : vector<24x128xf32> to vector<24x128xbf16>
    %cst_106 = arith.constant dense<0.000000e+00> : vector<24x128xf32>
    %275 = tpu.matmul %273, %274, %cst_106 {dimension_numbers = #tpu.dot_dimension_numbers<[1], [0], [0], [1], [0, 0, 1, 1], [], []>} : vector<24x24xbf16>, vector<24x128xbf16>, vector<24x128xf32> -> vector<24x128xf32>
    %c0_107 = arith.constant 0 : index
    %c0_108 = arith.constant 0 : index
    %276 = vector.load %arg6[%c0_107, %c0_108] : memref<24x1xf32, #tpu.memory_space<vmem>>, vector<24x1xf32>
    %277 = vector.broadcast %276 : vector<24x1xf32> to vector<24x128xf32>
    %278 = arith.addf %275, %277 : vector<24x128xf32>
    %279 = tpu.concatenate %272, %278 in 0 : vector<24x128xf32>, vector<24x128xf32> -> vector<48x128xf32>
    %c0_109 = arith.constant 0 : index
    %c0_110 = arith.constant 0 : index
    %280 = vector.load %arg9[%c0_109, %c0_110] : memref<48x8xbf16, #tpu.memory_space<vmem>>, vector<48x8xbf16>
    %cst_111 = arith.constant dense<0.000000e+00> : vector<48x128xf32>
    %281 = tpu.matmul %280, %1, %cst_111 {dimension_numbers = #tpu.dot_dimension_numbers<[1], [0], [0], [1], [0, 0, 1, 1], [], []>} : vector<48x8xbf16>, vector<8x128xbf16>, vector<48x128xf32> -> vector<48x128xf32>
    %c0_112 = arith.constant 0 : index
    %c0_113 = arith.constant 0 : index
    %282 = vector.load %arg10[%c0_112, %c0_113] : memref<48x1xf32, #tpu.memory_space<vmem>>, vector<48x1xf32>
    %283 = vector.broadcast %282 : vector<48x1xf32> to vector<48x128xf32>
    %284 = arith.addf %281, %283 : vector<48x128xf32>
    %285 = tpu.iota {dimensions = array<i32: 1>} : vector<48x128xi32>
    %c48_i32 = arith.constant 48 : i32
    %286 = vector.broadcast %c48_i32 : i32 to vector<48x128xi32>
    %287 = arith.cmpi slt, %285, %286 : vector<48x128xi32>
    %288 = arith.extui %287 : vector<48x128xi1> to vector<48x128xi32>
    %289 = arith.sitofp %288 : vector<48x128xi32> to vector<48x128xf32>
    %c0_114 = arith.constant 0 : index
    %c0_115 = arith.constant 0 : index
    %290 = vector.load %arg7[%c0_114, %c0_115] : memref<48x1xf32, #tpu.memory_space<vmem>>, vector<48x1xf32>
    %c0_116 = arith.constant 0 : index
    %c0_117 = arith.constant 0 : index
    %291 = vector.load %arg8[%c0_116, %c0_117] : memref<48x1xf32, #tpu.memory_space<vmem>>, vector<48x1xf32>
    %292 = arith.mulf %279, %289 : vector<48x128xf32>
    %cst_118 = arith.constant dense<0.000000e+00> : vector<48xf32>
    %293 = vector.multi_reduction <add>, %292, %cst_118 [1] : vector<48x128xf32> to vector<48xf32>
    %294 = vector.shape_cast %293 : vector<48xf32> to vector<48x1xf32>
    %cst_119 = arith.constant 0.020833334 : f32
    %295 = vector.broadcast %cst_119 : f32 to vector<48x1xf32>
    %296 = arith.mulf %294, %295 : vector<48x1xf32>
    %297 = vector.broadcast %296 : vector<48x1xf32> to vector<48x128xf32>
    %298 = arith.subf %279, %297 : vector<48x128xf32>
    %299 = arith.mulf %298, %289 : vector<48x128xf32>
    %300 = arith.mulf %299, %299 : vector<48x128xf32>
    %cst_120 = arith.constant dense<0.000000e+00> : vector<48xf32>
    %301 = vector.multi_reduction <add>, %300, %cst_120 [1] : vector<48x128xf32> to vector<48xf32>
    %302 = vector.shape_cast %301 : vector<48xf32> to vector<48x1xf32>
    %cst_121 = arith.constant 0.020833334 : f32
    %303 = vector.broadcast %cst_121 : f32 to vector<48x1xf32>
    %304 = arith.mulf %302, %303 : vector<48x1xf32>
    %cst_122 = arith.constant 9.99999974E-6 : f32
    %305 = vector.broadcast %cst_122 : f32 to vector<48x1xf32>
    %306 = arith.addf %304, %305 : vector<48x1xf32>
    %307 = math.rsqrt %306 : vector<48x1xf32>
    %308 = arith.mulf %290, %307 : vector<48x1xf32>
    %309 = arith.mulf %296, %308 : vector<48x1xf32>
    %310 = arith.subf %291, %309 : vector<48x1xf32>
    %c0_123 = arith.constant 0 : index
    %c0_124 = arith.constant 0 : index
    %311 = vector.load %arg11[%c0_123, %c0_124] : memref<48x1xf32, #tpu.memory_space<vmem>>, vector<48x1xf32>
    %c0_125 = arith.constant 0 : index
    %c0_126 = arith.constant 0 : index
    %312 = vector.load %arg12[%c0_125, %c0_126] : memref<48x1xf32, #tpu.memory_space<vmem>>, vector<48x1xf32>
    %313 = arith.mulf %284, %289 : vector<48x128xf32>
    %cst_127 = arith.constant dense<0.000000e+00> : vector<48xf32>
    %314 = vector.multi_reduction <add>, %313, %cst_127 [1] : vector<48x128xf32> to vector<48xf32>
    %315 = vector.shape_cast %314 : vector<48xf32> to vector<48x1xf32>
    %cst_128 = arith.constant 0.020833334 : f32
    %316 = vector.broadcast %cst_128 : f32 to vector<48x1xf32>
    %317 = arith.mulf %315, %316 : vector<48x1xf32>
    %318 = vector.broadcast %317 : vector<48x1xf32> to vector<48x128xf32>
    %319 = arith.subf %284, %318 : vector<48x128xf32>
    %320 = arith.mulf %319, %289 : vector<48x128xf32>
    %321 = arith.mulf %320, %320 : vector<48x128xf32>
    %cst_129 = arith.constant dense<0.000000e+00> : vector<48xf32>
    %322 = vector.multi_reduction <add>, %321, %cst_129 [1] : vector<48x128xf32> to vector<48xf32>
    %323 = vector.shape_cast %322 : vector<48xf32> to vector<48x1xf32>
    %cst_130 = arith.constant 0.020833334 : f32
    %324 = vector.broadcast %cst_130 : f32 to vector<48x1xf32>
    %325 = arith.mulf %323, %324 : vector<48x1xf32>
    %cst_131 = arith.constant 9.99999974E-6 : f32
    %326 = vector.broadcast %cst_131 : f32 to vector<48x1xf32>
    %327 = arith.addf %325, %326 : vector<48x1xf32>
    %328 = math.rsqrt %327 : vector<48x1xf32>
    %329 = arith.mulf %311, %328 : vector<48x1xf32>
    %330 = arith.mulf %317, %329 : vector<48x1xf32>
    %331 = arith.subf %312, %330 : vector<48x1xf32>
    %332 = vector.broadcast %308 : vector<48x1xf32> to vector<48x128xf32>
    %333 = arith.mulf %279, %332 : vector<48x128xf32>
    %334 = vector.broadcast %310 : vector<48x1xf32> to vector<48x128xf32>
    %335 = arith.addf %333, %334 : vector<48x128xf32>
    %cst_132 = arith.constant 0.000000e+00 : f32
    %336 = vector.broadcast %cst_132 : f32 to vector<48x128xf32>
    %337 = arith.maximumf %335, %336 : vector<48x128xf32>
    %338 = vector.broadcast %329 : vector<48x1xf32> to vector<48x128xf32>
    %339 = arith.mulf %284, %338 : vector<48x128xf32>
    %340 = arith.addf %337, %339 : vector<48x128xf32>
    %341 = vector.broadcast %331 : vector<48x1xf32> to vector<48x128xf32>
    %342 = arith.addf %340, %341 : vector<48x128xf32>
    %c0_133 = arith.constant 0 : index
    %c0_134 = arith.constant 0 : index
    %343 = vector.load %arg13[%c0_133, %c0_134] : memref<48x128xf32, #tpu.memory_space<vmem>>, vector<48x128xf32>
    tpu.vector_store %arg13[%c0_133, %c0_134], %342 {strides = array<i32>} : memref<48x128xf32, #tpu.memory_space<vmem>>, vector<48x128xf32>,
    return
  }
}

</mosaic_0001>

<llo_original>
// kernel: msd_block.1
$region0: #{msd_block.1}
  #allocation0 [shape = 'u32[]', space=smem, size = 0x4, offset = 0x4, fixed_abs, tag = 'smem constant byte address 0x4 - core index']
  #allocation1 [shape = 'u32[144,128]{1,0:T(1,128)}', space=vmem, size = 0x12000, scoped, tag = 'internal scratch']
  %s0 = inlined_call_operand.hbm [shape: f32[8,128], index: 0, kind: input, shape index: {}]
  %s1 = inlined_call_operand.hbm [shape: bf16[8,8], index: 1, kind: input, shape index: {}]
  %s2 = inlined_call_operand.hbm [shape: f32[8,1], index: 2, kind: input, shape index: {}]
  %s3 = inlined_call_operand.hbm [shape: bf16[24,168], index: 3, kind: input, shape index: {}]
  %s4 = inlined_call_operand.hbm [shape: f32[24,1], index: 4, kind: input, shape index: {}]
  %s5 = inlined_call_operand.hbm [shape: bf16[24,24], index: 5, kind: input, shape index: {}]
  %s6 = inlined_call_operand.hbm [shape: f32[24,1], index: 6, kind: input, shape index: {}]
  %s7 = inlined_call_operand.hbm [shape: f32[48,1], index: 7, kind: input, shape index: {}]
  %s8 = inlined_call_operand.hbm [shape: f32[48,1], index: 8, kind: input, shape index: {}]
  %s9 = inlined_call_operand.hbm [shape: bf16[48,8], index: 9, kind: input, shape index: {}]
  %s10 = inlined_call_operand.hbm [shape: f32[48,1], index: 10, kind: input, shape index: {}]
  %s11 = inlined_call_operand.hbm [shape: f32[48,1], index: 11, kind: input, shape index: {}]
  %s12 = inlined_call_operand.hbm [shape: f32[48,1], index: 12, kind: input, shape index: {}]
  %s13 = inlined_call_operand.hbm [shape: f32[48,128], index: 13, kind: output, shape index: {}]
  %s14 = sld [smem:[#allocation0]]
  $region114: #{msd_block.1} parent=0
    _
  %s16 = ssub.s32 1, %s14
  %s17 = scalar_select 0, %s16, %s14
  $region1: #{msd_block.1} parent=0
    #allocation2 [shape = 'u8[4096]{0}', space=vmem, size = 0x1000, scoped, tag = 'input window, operand 0, single buffered']
    #allocation3 [shape = 's32[1]{0}', space=sflag, size = 0x4, scoped, tag = 'scoped memory for msd_block.1']
    #allocation4 [shape = 's32[1]{0}', space=sflag, size = 0x4, scoped, tag = 'scoped memory for msd_block.1']
    #allocation5 [shape = 'u8[2048]{0}', space=vmem, size = 0x800, scoped, tag = 'input window, operand 1, single buffered']
    #allocation6 [shape = 's32[1]{0}', space=sflag, size = 0x4, scoped, tag = 'scoped memory for msd_block.1']
    #allocation7 [shape = 'u8[4096]{0}', space=vmem, size = 0x1000, scoped, tag = 'input window, operand 2, single buffered']
    #allocation8 [shape = 'u8[12288]{0}', space=vmem, size = 0x3000, scoped, tag = 'input window, operand 3, single buffered']
    #allocation9 [shape = 's32[1]{0}', space=sflag, size = 0x4, scoped, tag = 'scoped memory for msd_block.1']
    #allocation10 [shape = 'u8[12288]{0}', space=vmem, size = 0x3000, scoped, tag = 'input window, operand 4, single buffered']
    #allocation11 [shape = 'u8[6144]{0}', space=vmem, size = 0x1800, scoped, tag = 'input window, operand 5, single buffered']
    #allocation12 [shape = 's32[1]{0}', space=sflag, size = 0x4, scoped, tag = 'scoped memory for msd_block.1']
    #allocation13 [shape = 'u8[12288]{0}', space=vmem, size = 0x3000, scoped, tag = 'input window, operand 6, single buffered']
    #allocation14 [shape = 'u8[24576]{0}', space=vmem, size = 0x6000, scoped, tag = 'input window, operand 7, single buffered']
    #allocation15 [shape = 's32[1]{0}', space=sflag, size = 0x4, scoped, tag = 'scoped memory for msd_block.1']
    #allocation16 [shape = 'u8[24576]{0}', space=vmem, size = 0x6000, scoped, tag = 'input window, operand 8, single buffered']
    #allocation17 [shape = 'u8[12288]{0}', space=vmem, size = 0x3000, scoped, tag = 'input window, operand 9, single buffered']
    #allocation18 [shape = 's32[1]{0}', space=sflag, size = 0x4, scoped, tag = 'scoped memory for msd_block.1']
    #allocation19 [shape = 'u8[24576]{0}', space=vmem, size = 0x6000, scoped, tag = 'input window, operand 10, single buffered']
    #allocation20 [shape = 'u8[24576]{0}', space=vmem, size = 0x6000, scoped, tag = 'input window, operand 11, single buffered']
    #allocation21 [shape = 's32[1]{0}', space=sflag, size = 0x4, scoped, tag = 'scoped memory for msd_block.1']
    #allocation22 [shape = 'u8[24576]{0}', space=vmem, size = 0x6000, scoped, tag = 'input window, operand 12, single buffered']
    #allocation23 [shape = 'u8[24576]{0}', space=vmem, size = 0x6000, scoped, tag = 'output window, operand 0, single buffered']
    %18 = vsyncpa [#allocation3], 0
    %19 = vsyncpa [#allocation6], 0
    %20 = vsyncpa [#allocation9], 0
    %21 = vsyncpa [#allocation12], 0
    %22 = vsyncpa [#allocation15], 0
    %23 = vsyncpa [#allocation18], 0
    %24 = vsyncpa [#allocation21], 0
    %25 = vsyncpa [#allocation4], 0
    // Predicated region
    $region2: #{msd_block.1} parent=1 // pred_check
      _
    $region3: #{msd_block.1} parent=1 // pred_check_branch
      %27 = sbr.rel (0) target = $region5
    $region4: #{msd_block.1} parent=1 // pred_region
      %s29 = ssub.s32 128, 128
      %30 = vsyncadd [#allocation3], %s29
      %s32 = sshll.u32 [#allocation2], 4
      %s33 = int_to_ptr.vmem [resolvable:$true] %s32
      %35 = dma.hbm_to_vmem [thread:$0]  %s0, 128, %s33, [#allocation3]
    $region5: #{msd_block.1} parent=1 // pred_fallthru
      _
    // Predicated region
    $region6: #{msd_block.1} parent=1 // pred_check
      _
    $region7: #{msd_block.1} parent=1 // pred_check_branch
      %37 = sbr.rel (0) target = $region9
    $region8: #{msd_block.1} parent=1 // pred_region
      %s39 = ssub.s32 64, 64
      %40 = vsyncadd [#allocation6], %s39
      %s42 = sshll.u32 [#allocation5], 4
      %s43 = int_to_ptr.vmem [resolvable:$true] %s42
      %45 = dma.hbm_to_vmem [thread:$0]  %s1, 64, %s43, [#allocation6]
    $region9: #{msd_block.1} parent=1 // pred_fallthru
      _
    // Predicated region
    $region10: #{msd_block.1} parent=1 // pred_check
      _
    $region11: #{msd_block.1} parent=1 // pred_check_branch
      %47 = sbr.rel (0) target = $region13
    $region12: #{msd_block.1} parent=1 // pred_region
      %s49 = ssub.s32 128, 128
      %50 = vsyncadd [#allocation6], %s49
      %s52 = sshll.u32 [#allocation7], 4
      %s53 = int_to_ptr.vmem [resolvable:$true] %s52
      %55 = dma.hbm_to_vmem [thread:$0]  %s2, 128, %s53, [#allocation6]
    $region13: #{msd_block.1} parent=1 // pred_fallthru
      _
    // Predicated region
    $region14: #{msd_block.1} parent=1 // pred_check
      _
    $region15: #{msd_block.1} parent=1 // pred_check_branch
      %57 = sbr.rel (0) target = $region17
    $region16: #{msd_block.1} parent=1 // pred_region
      %s59 = ssub.s32 384, 384
      %60 = vsyncadd [#allocation9], %s59
      %s61 = sshll.u32 [#allocation8], 4
      %s62 = int_to_ptr.vmem [resolvable:$true] %s61
      %67 = dma.hbm_to_vmem [thread:$0]  %s3, 384, %s62, [#allocation9], 128, 128, 8
    $region17: #{msd_block.1} parent=1 // pred_fallthru
      _
    // Predicated region
    $region18: #{msd_block.1} parent=1 // pred_check
      _
    $region19: #{msd_block.1} parent=1 // pred_check_branch
      %69 = sbr.rel (0) target = $region21
    $region20: #{msd_block.1} parent=1 // pred_region
      %s71 = ssub.s32 384, 384
      %72 = vsyncadd [#allocation9], %s71
      %s73 = sshll.u32 [#allocation10], 4
      %s74 = int_to_ptr.vmem [resolvable:$true] %s73
      %79 = dma.hbm_to_vmem [thread:$0]  %s4, 384, %s74, [#allocation9], 128, 128, 8
    $region21: #{msd_block.1} parent=1 // pred_fallthru
      _
    // Predicated region
    $region22: #{msd_block.1} parent=1 // pred_check
      _
    $region23: #{msd_block.1} parent=1 // pred_check_branch
      %81 = sbr.rel (0) target = $region25
    $region24: #{msd_block.1} parent=1 // pred_region
      %s83 = ssub.s32 192, 192
      %84 = vsyncadd [#allocation12], %s83
      %s85 = sshll.u32 [#allocation11], 4
      %s86 = int_to_ptr.vmem [resolvable:$true] %s85
      %91 = dma.hbm_to_vmem [thread:$0]  %s5, 192, %s86, [#allocation12], 64, 64, 4
    $region25: #{msd_block.1} parent=1 // pred_fallthru
      _
    // Predicated region
    $region26: #{msd_block.1} parent=1 // pred_check
      _
    $region27: #{msd_block.1} parent=1 // pred_check_branch
      %93 = sbr.rel (0) target = $region29
    $region28: #{msd_block.1} parent=1 // pred_region
      %s95 = ssub.s32 384, 384
      %96 = vsyncadd [#allocation12], %s95
      %s97 = sshll.u32 [#allocation13], 4
      %s98 = int_to_ptr.vmem [resolvable:$true] %s97
      %103 = dma.hbm_to_vmem [thread:$0]  %s6, 384, %s98, [#allocation12], 128, 128, 8
    $region29: #{msd_block.1} parent=1 // pred_fallthru
      _
    // Predicated region
    $region30: #{msd_block.1} parent=1 // pred_check
      _
    $region31: #{msd_block.1} parent=1 // pred_check_branch
      %105 = sbr.rel (0) target = $region33
    $region32: #{msd_block.1} parent=1 // pred_region
      %s107 = ssub.s32 768, 768
      %108 = vsyncadd [#allocation15], %s107
      %s109 = sshll.u32 [#allocation14], 4
      %s110 = int_to_ptr.vmem [resolvable:$true] %s109
      %115 = dma.hbm_to_vmem [thread:$0]  %s7, 768, %s110, [#allocation15], 128, 128, 8
    $region33: #{msd_block.1} parent=1 // pred_fallthru
      _
    // Predicated region
    $region34: #{msd_block.1} parent=1 // pred_check
      _
    $region35: #{msd_block.1} parent=1 // pred_check_branch
      %117 = sbr.rel (0) target = $region37
    $region36: #{msd_block.1} parent=1 // pred_region
      %s119 = ssub.s32 768, 768
      %120 = vsyncadd [#allocation15], %s119
      %s121 = sshll.u32 [#allocation16], 4
      %s122 = int_to_ptr.vmem [resolvable:$true] %s121
      %127 = dma.hbm_to_vmem [thread:$0]  %s8, 768, %s122, [#allocation15], 128, 128, 8
    $region37: #{msd_block.1} parent=1 // pred_fallthru
      _
    // Predicated region
    $region38: #{msd_block.1} parent=1 // pred_check
      _
    $region39: #{msd_block.1} parent=1 // pred_check_branch
      %129 = sbr.rel (0) target = $region41
    $region40: #{msd_block.1} parent=1 // pred_region
      %s131 = ssub.s32 384, 384
      %132 = vsyncadd [#allocation18], %s131
      %s133 = sshll.u32 [#allocation17], 4
      %s134 = int_to_ptr.vmem [resolvable:$true] %s133
      %139 = dma.hbm_to_vmem [thread:$0]  %s9, 384, %s134, [#allocation18], 64, 64, 4
    $region41: #{msd_block.1} parent=1 // pred_fallthru
      _
    // Predicated region
    $region42: #{msd_block.1} parent=1 // pred_check
      _
    $region43: #{msd_block.1} parent=1 // pred_check_branch
      %141 = sbr.rel (0) target = $region45
    $region44: #{msd_block.1} parent=1 // pred_region
      %s143 = ssub.s32 768, 768
      %144 = vsyncadd [#allocation18], %s143
      %s145 = sshll.u32 [#allocation19], 4
      %s146 = int_to_ptr.vmem [resolvable:$true] %s145
      %151 = dma.hbm_to_vmem [thread:$0]  %s10, 768, %s146, [#allocation18], 128, 128, 8
    $region45: #{msd_block.1} parent=1 // pred_fallthru
      _
    // Predicated region
    $region46: #{msd_block.1} parent=1 // pred_check
      _
    $region47: #{msd_block.1} parent=1 // pred_check_branch
      %153 = sbr.rel (0) target = $region49
    $region48: #{msd_block.1} parent=1 // pred_region
      %s155 = ssub.s32 768, 768
      %156 = vsyncadd [#allocation21], %s155
      %s157 = sshll.u32 [#allocation20], 4
      %s158 = int_to_ptr.vmem [resolvable:$true] %s157
      %163 = dma.hbm_to_vmem [thread:$0]  %s11, 768, %s158, [#allocation21], 128, 128, 8
    $region49: #{msd_block.1} parent=1 // pred_fallthru
      _
    // Predicated region
    $region50: #{msd_block.1} parent=1 // pred_check
      _
    $region51: #{msd_block.1} parent=1 // pred_check_branch
      %165 = sbr.rel (0) target = $region53
    $region52: #{msd_block.1} parent=1 // pred_region
      %s167 = ssub.s32 768, 768
      %168 = vsyncadd [#allocation21], %s167
      %s169 = sshll.u32 [#allocation22], 4
      %s170 = int_to_ptr.vmem [resolvable:$true] %s169
      %175 = dma.hbm_to_vmem [thread:$0]  %s12, 768, %s170, [#allocation21], 128, 128, 8
    $region53: #{msd_block.1} parent=1 // pred_fallthru
      _
    // Predicated region
    $region54: #{msd_block.1} parent=1 // pred_check
      _
    $region55: #{msd_block.1} parent=1 // pred_check_branch
      %177 = sbr.rel (0) target = $region57
    $region56: #{msd_block.1} parent=1 // pred_region
      %178 = dma.done [#allocation3], 128
    $region57: #{msd_block.1} parent=1 // pred_fallthru
      _
    // Predicated region
    $region58: #{msd_block.1} parent=1 // pred_check
      _
    $region59: #{msd_block.1} parent=1 // pred_check_branch
      %180 = sbr.rel (0) target = $region61
    $region60: #{msd_block.1} parent=1 // pred_region
      %181 = dma.done [#allocation6], 64
    $region61: #{msd_block.1} parent=1 // pred_fallthru
      _
    // Predicated region
    $region62: #{msd_block.1} parent=1 // pred_check
      _
    $region63: #{msd_block.1} parent=1 // pred_check_branch
      %183 = sbr.rel (0) target = $region65
    $region64: #{msd_block.1} parent=1 // pred_region
      %184 = dma.done [#allocation6], 128
    $region65: #{msd_block.1} parent=1 // pred_fallthru
      _
    // Predicated region
    $region66: #{msd_block.1} parent=1 // pred_check
      _
    $region67: #{msd_block.1} parent=1 // pred_check_branch
      %186 = sbr.rel (0) target = $region69
    $region68: #{msd_block.1} parent=1 // pred_region
      %187 = dma.done [#allocation9], 384
    $region69: #{msd_block.1} parent=1 // pred_fallthru
      _
    // Predicated region
    $region70: #{msd_block.1} parent=1 // pred_check
      _
    $region71: #{msd_block.1} parent=1 // pred_check_branch
      %189 = sbr.rel (0) target = $region73
    $region72: #{msd_block.1} parent=1 // pred_region
      %190 = dma.done [#allocation9], 384
    $region73: #{msd_block.1} parent=1 // pred_fallthru
      _
    // Predicated region
    $region74: #{msd_block.1} parent=1 // pred_check
      _
    $region75: #{msd_block.1} parent=1 // pred_check_branch
      %192 = sbr.rel (0) target = $region77
    $region76: #{msd_block.1} parent=1 // pred_region
      %193 = dma.done [#allocation12], 192
    $region77: #{msd_block.1} parent=1 // pred_fallthru
      _
    // Predicated region
    $region78: #{msd_block.1} parent=1 // pred_check
      _
    $region79: #{msd_block.1} parent=1 // pred_check_branch
      %195 = sbr.rel (0) target = $region81
    $region80: #{msd_block.1} parent=1 // pred_region
      %196 = dma.done [#allocation12], 384
    $region81: #{msd_block.1} parent=1 // pred_fallthru
      _
    // Predicated region
    $region82: #{msd_block.1} parent=1 // pred_check
      _
    $region83: #{msd_block.1} parent=1 // pred_check_branch
      %198 = sbr.rel (0) target = $region85
    $region84: #{msd_block.1} parent=1 // pred_region
      %199 = dma.done [#allocation15], 768
    $region85: #{msd_block.1} parent=1 // pred_fallthru
      _
    // Predicated region
    $region86: #{msd_block.1} parent=1 // pred_check
      _
    $region87: #{msd_block.1} parent=1 // pred_check_branch
      %201 = sbr.rel (0) target = $region89
    $region88: #{msd_block.1} parent=1 // pred_region
      %202 = dma.done [#allocation15], 768
    $region89: #{msd_block.1} parent=1 // pred_fallthru
      _
    // Predicated region
    $region90: #{msd_block.1} parent=1 // pred_check
      _
    $region91: #{msd_block.1} parent=1 // pred_check_branch
      %204 = sbr.rel (0) target = $region93
    $region92: #{msd_block.1} parent=1 // pred_region
      %205 = dma.done [#allocation18], 384
    $region93: #{msd_block.1} parent=1 // pred_fallthru
      _
    // Predicated region
    $region94: #{msd_block.1} parent=1 // pred_check
      _
    $region95: #{msd_block.1} parent=1 // pred_check_branch
      %207 = sbr.rel (0) target = $region97
    $region96: #{msd_block.1} parent=1 // pred_region
      %208 = dma.done [#allocation18], 768
    $region97: #{msd_block.1} parent=1 // pred_fallthru
      _
    // Predicated region
    $region98: #{msd_block.1} parent=1 // pred_check
      _
    $region99: #{msd_block.1} parent=1 // pred_check_branch
      %210 = sbr.rel (0) target = $region101
    $region100: #{msd_block.1} parent=1 // pred_region
      %211 = dma.done [#allocation21], 768
    $region101: #{msd_block.1} parent=1 // pred_fallthru
      _
    // Predicated region
    $region102: #{msd_block.1} parent=1 // pred_check
      _
    $region103: #{msd_block.1} parent=1 // pred_check_branch
      %213 = sbr.rel (0) target = $region105
    $region104: #{msd_block.1} parent=1 // pred_region
      %214 = dma.done [#allocation21], 768
    $region105: #{msd_block.1} parent=1 // pred_fallthru
      _
    %v216 = vld [vmem:[#allocation2] sm:$0xff]
    %v217 = vpack.c.bf16 %v216, %v216
    %v218 = vld [vmem:[#allocation5] sm:$0xf]
    %v219 = vld [vmem:[#allocation7] sm:$0xff]
    %221 = vset.pattern.permute.xlu0 0
    %222 = vperm.xlu0 %221, %v219
    %v223 = vpop.permute.xlu0 %222
    %vm225 = vcmask 64512
    %v227 = vsel %vm225, %v218, 0
    %vm229 = vcmask 1043456
    %v231 = vsel %vm229, %v217, 0
    %233 = vmatprep.subr.bf16.mxu0 0
    %234 = vmatpush1.bf16.msra.mxu0 %v231
    %235 = vmatprep.subr.bf16.mxu0 0
    %236 = vmatpush1.bf16.msra.mxu0 0
    %237 = vmatprep.subr.bf16.mxu0 0
    %238 = vmatpush1.bf16.msra.mxu0 0
    %239 = vmatprep.subr.bf16.mxu0 0
    %240 = vmatpush1.bf16.msra.mxu0 0
    %241 = vmatprep.subr.bf16.mxu0 0
    %242 = vmatpush1.bf16.msra.mxu0 0
    %243 = vmatprep.subr.bf16.mxu0 0
    %244 = vmatpush1.bf16.msra.mxu0 0
    %245 = vmatprep.subr.bf16.mxu0 0
    %246 = vmatpush1.bf16.msra.mxu0 0
    %247 = vmatprep.subr.bf16.mxu0 0
    %248 = vmatpush1.bf16.msra.mxu0 0
    %249 = vmatprep.subr.bf16.mxu0 0
    %250 = vmatpush1.bf16.msra.mxu0 0
    %251 = vmatprep.subr.bf16.mxu0 0
    %252 = vmatpush1.bf16.msra.mxu0 0
    %253 = vmatprep.subr.bf16.mxu0 0
    %254 = vmatpush1.bf16.msra.mxu0 0
    %255 = vmatprep.subr.bf16.mxu0 0
    %256 = vmatpush1.bf16.msra.mxu0 0
    %257 = vmatprep.subr.bf16.mxu0 0
    %258 = vmatpush1.bf16.msra.mxu0 0
    %259 = vmatprep.subr.bf16.mxu0 0
    %260 = vmatpush1.bf16.msra.mxu0 0
    %261 = vmatprep.subr.bf16.mxu0 0
    %262 = vmatpush1.bf16.msra.mxu0 0
    %263 = vmatprep.subr.bf16.mxu0 0
    %264 = vmatpush1.bf16.msra.mxu0 0
    %265 = vmatprep.mubr.bf16.mxu0 0
    %266 = vmatmul.mubr.bf16.gmra.mrb[0].mxu0 %v227
    %v267 = vpop.f32.mrb[0].mxu0
    %v268 = vadd.f32 %v223, %v267
    %v269 = vpop.f32.mrb[0].mxu0
    %v270 = vpop.f32.mrb[0].mxu0
    %v271 = vpop.f32.mrb[0].mxu0
    %272 = vdwg.mxu0
    %v273 = vlaneseq
    %v274 = vand.u32 %v273, 127
    %vm275 = vcmp.lt.s32.totalorder %v274, 0
    %v276 = vsub.s32 0, %v274
    %v277 = vsel %vm275, %v276, %v274
    %v278 = vmul.u32.u64.compose %v277, 2863311531
    %v279 = vextract.low.u32 %v278
    %v280 = vextract.high.u32 %v278
    %v281 = vshrl.u32 %v280, 4
    %v282 = vmul.u32 %v281, 24
    %v283 = vsub.s32 %v277, %v282
    %v284 = vsub.s32 0, %v283
    %v285 = vsel %vm275, %v284, %v283
    %vm286 = vcmp.ne.s32.totalorder %v285, 0
    %vm287 = vcmp.lt.s32.totalorder %v285, 0
    %vm288 = vmand %vm287, %vm286
    %v289 = vadd.s32 %v285, 24
    %v290 = vsel %vm288, %v289, %v285
    %291 = vrot.lane.b32.xlu0 %v268, 15
    %v292 = vpop.permute.xlu0 %291
    %v293 = vadd.s32 %v290, 4294967281
    %vm294 = vcmp.ge.s32.totalorder %v293, 0
    %vm295 = vcmp.lt.s32.totalorder %v293, 24
    %vm296 = vmand %vm294, %vm295
    %v297 = vsel %vm296, %v292, 0.0
    %298 = vrot.lane.b32.xlu0 %v268, 12
    %v299 = vpop.permute.xlu0 %298
    %v300 = vadd.s32 %v290, 4294967284
    %vm301 = vcmp.ge.s32.totalorder %v300, 0
    %vm302 = vcmp.lt.s32.totalorder %v300, 24
    %vm303 = vmand %vm301, %vm302
    %v304 = vsel %vm303, %v299, 0.0
    %305 = vrot.lane.b32.xlu0 %v268, 10
    %v306 = vpop.permute.xlu0 %305
    %v307 = vadd.s32 %v290, 4294967286
    %vm308 = vcmp.ge.s32.totalorder %v307, 0
    %vm309 = vcmp.lt.s32.totalorder %v307, 24
    %vm310 = vmand %vm308, %vm309
    %v311 = vsel %vm310, %v306, 0.0
    %312 = vrot.lane.b32.xlu0 %v268, 8
    %v313 = vpop.permute.xlu0 %312
    %v314 = vadd.s32 %v290, 4294967288
    %vm315 = vcmp.ge.s32.totalorder %v314, 0
    %vm316 = vcmp.lt.s32.totalorder %v314, 24
    %vm317 = vmand %vm315, %vm316
    %v318 = vsel %vm317, %v313, 0.0
    %319 = vrot.lane.b32.xlu0 %v268, 6
    %v320 = vpop.permute.xlu0 %319
    %v321 = vadd.s32 %v290, 4294967290
    %vm322 = vcmp.ge.s32.totalorder %v321, 0
    %vm323 = vcmp.lt.s32.totalorder %v321, 24
    %vm324 = vmand %vm322, %vm323
    %v325 = vsel %vm324, %v320, 0.0
    %326 = vrot.lane.b32.xlu0 %v268, 5
    %v327 = vpop.permute.xlu0 %326
    %v328 = vadd.s32 %v290, 4294967291
    %vm329 = vcmp.ge.s32.totalorder %v328, 0
    %vm330 = vcmp.lt.s32.totalorder %v328, 24
    %vm331 = vmand %vm329, %vm330
    %v332 = vsel %vm331, %v327, 0.0
    %333 = vrot.lane.b32.xlu0 %v268, 4
    %v334 = vpop.permute.xlu0 %333
    %v335 = vadd.s32 %v290, 4294967292
    %vm336 = vcmp.ge.s32.totalorder %v335, 0
    %vm337 = vcmp.lt.s32.totalorder %v335, 24
    %vm338 = vmand %vm336, %vm337
    %v339 = vsel %vm338, %v334, 0.0
    %340 = vrot.lane.b32.xlu0 %v268, 3
    %v341 = vpop.permute.xlu0 %340
    %v342 = vadd.s32 %v290, 4294967293
    %vm343 = vcmp.ge.s32.totalorder %v342, 0
    %vm344 = vcmp.lt.s32.totalorder %v342, 24
    %vm345 = vmand %vm343, %vm344
    %v346 = vsel %vm345, %v341, 0.0
    %347 = vrot.lane.b32.xlu0 %v268, 2
    %v348 = vpop.permute.xlu0 %347
    %v349 = vadd.s32 %v290, 4294967294
    %vm350 = vcmp.ge.s32.totalorder %v349, 0
    %vm351 = vcmp.lt.s32.totalorder %v349, 24
    %vm352 = vmand %vm350, %vm351
    %v353 = vsel %vm352, %v348, 0.0
    %354 = vrot.lane.b32.xlu0 %v268, 1
    %v355 = vpop.permute.xlu0 %354
    %v356 = vadd.s32 %v290, 4294967295
    %vm357 = vcmp.ge.s32.totalorder %v356, 0
    %vm358 = vcmp.lt.s32.totalorder %v356, 24
    %vm359 = vmand %vm357, %vm358
    %v360 = vsel %vm359, %v355, 0.0
    %361 = vrot.lane.b32.xlu0 %v268, 127
    %v362 = vpop.permute.xlu0 %361
    %v363 = vadd.s32 %v290, 1
    %vm364 = vcmp.ge.s32.totalorder %v363, 0
    %vm365 = vcmp.lt.s32.totalorder %v363, 24
    %vm366 = vmand %vm364, %vm365
    %v367 = vsel %vm366, %v362, 0.0
    %368 = vrot.lane.b32.xlu0 %v268, 126
    %v369 = vpop.permute.xlu0 %368
    %v370 = vadd.s32 %v290, 2
    %vm371 = vcmp.ge.s32.totalorder %v370, 0
    %vm372 = vcmp.lt.s32.totalorder %v370, 24
    %vm373 = vmand %vm371, %vm372
    %v374 = vsel %vm373, %v369, 0.0
    %375 = vrot.lane.b32.xlu0 %v268, 125
    %v376 = vpop.permute.xlu0 %375
    %v377 = vadd.s32 %v290, 3
    %vm378 = vcmp.ge.s32.totalorder %v377, 0
    %vm379 = vcmp.lt.s32.totalorder %v377, 24
    %vm380 = vmand %vm378, %vm379
    %v381 = vsel %vm380, %v376, 0.0
    %382 = vrot.lane.b32.xlu0 %v268, 124
    %v383 = vpop.permute.xlu0 %382
    %v384 = vadd.s32 %v290, 4
    %vm385 = vcmp.ge.s32.totalorder %v384, 0
    %vm386 = vcmp.lt.s32.totalorder %v384, 24
    %vm387 = vmand %vm385, %vm386
    %v388 = vsel %vm387, %v383, 0.0
    %389 = vrot.lane.b32.xlu0 %v268, 123
    %v390 = vpop.permute.xlu0 %389
    %v391 = vadd.s32 %v290, 5
    %vm392 = vcmp.ge.s32.totalorder %v391, 0
    %vm393 = vcmp.lt.s32.totalorder %v391, 24
    %vm394 = vmand %vm392, %vm393
    %v395 = vsel %vm394, %v390, 0.0
    %396 = vrot.lane.b32.xlu0 %v268, 122
    %v397 = vpop.permute.xlu0 %396
    %v398 = vadd.s32 %v290, 6
    %vm399 = vcmp.ge.s32.totalorder %v398, 0
    %vm400 = vcmp.lt.s32.totalorder %v398, 24
    %vm401 = vmand %vm399, %vm400
    %v402 = vsel %vm401, %v397, 0.0
    %403 = vrot.lane.b32.xlu0 %v268, 120
    %v404 = vpop.permute.xlu0 %403
    %v405 = vadd.s32 %v290, 8
    %vm406 = vcmp.ge.s32.totalorder %v405, 0
    %vm407 = vcmp.lt.s32.totalorder %v405, 24
    %vm408 = vmand %vm406, %vm407
    %v409 = vsel %vm408, %v404, 0.0
    %410 = vrot.lane.b32.xlu0 %v268, 118
    %v411 = vpop.permute.xlu0 %410
    %v412 = vadd.s32 %v290, 10
    %vm413 = vcmp.ge.s32.totalorder %v412, 0
    %vm414 = vcmp.lt.s32.totalorder %v412, 24
    %vm415 = vmand %vm413, %vm414
    %v416 = vsel %vm415, %v411, 0.0
    %417 = vrot.lane.b32.xlu0 %v268, 116
    %v418 = vpop.permute.xlu0 %417
    %v419 = vadd.s32 %v290, 12
    %vm420 = vcmp.ge.s32.totalorder %v419, 0
    %vm421 = vcmp.lt.s32.totalorder %v419, 24
    %vm422 = vmand %vm420, %vm421
    %v423 = vsel %vm422, %v418, 0.0
    %424 = vrot.lane.b32.xlu0 %v268, 113
    %v425 = vpop.permute.xlu0 %424
    %v426 = vadd.s32 %v290, 15
    %vm427 = vcmp.ge.s32.totalorder %v426, 0
    %vm428 = vcmp.lt.s32.totalorder %v426, 24
    %vm429 = vmand %vm427, %vm428
    %v430 = vsel %vm429, %v425, 0.0
    %v431 = vpack.c.bf16 %v304, %v297
    %v432 = vpack.c.bf16 %v318, %v311
    %v433 = vpack.c.bf16 %v332, %v325
    %v434 = vpack.c.bf16 %v346, %v339
    %v435 = vpack.c.bf16 %v360, %v353
    %v436 = vpack.c.bf16 %v367, %v268
    %v437 = vpack.c.bf16 %v381, %v374
    %v438 = vpack.c.bf16 %v395, %v388
    %v439 = vpack.c.bf16 %v409, %v402
    %v440 = vpack.c.bf16 %v423, %v416
    %v441 = vpack.c.bf16 %v430, %v430
    %v442 = vld [vmem:[#allocation8] sm:$0xff]
    %v443 = vld [vmem:[#allocation8 + $0x8] sm:$0xff]
    %v444 = vld [vmem:[#allocation8 + $0x10] sm:$0xff]
    %v445 = vld [vmem:[#allocation10] sm:$0xff]
    %v446 = vld [vmem:[#allocation10 + $0x8] sm:$0xff]
    %v447 = vld [vmem:[#allocation10 + $0x10] sm:$0xff]
    %449 = vset.pattern.permute.xlu0 0
    %450 = vperm.xlu0 %449, %v445
    %v451 = vpop.permute.xlu0 %450
    %454 = vset.pattern.permute.xlu0 0
    %455 = vperm.xlu0 %454, %v446
    %v456 = vpop.permute.xlu0 %455
    %459 = vset.pattern.permute.xlu0 0
    %460 = vperm.xlu0 %459, %v447
    %v461 = vpop.permute.xlu0 %460
    %v466 = vunpack.c.l.b16 %v442
    %v467 = vunpack.c.h.b16 %v442
    %v468 = vunpack.c.l.b16 %v443
    %v469 = vunpack.c.h.b16 %v443
    %v470 = vunpack.c.l.b16 %v444
    %v471 = vunpack.c.h.b16 %v444
    %v472 = vpack.c.b16 %v468, %v466
    %v473 = vpack.c.b16 %v469, %v467
    %v474 = vpack.c.b16 %v470, %v470
    %v475 = vpack.c.b16 %v471, %v471
    %vm478 = vcmask 326656
    %v480 = vsel %vm478, %v473, 0
    %v483 = vsel %vm478, %v475, 0
    %v486 = vsel %vm229, %v441, 0
    %488 = vmatprep.subr.bf16.mxu0 0
    %489 = vmatpush1.bf16.msra.mxu0 %v431
    %490 = vmatprep.subr.bf16.mxu0 0
    %491 = vmatpush1.bf16.msra.mxu0 %v432
    %492 = vmatprep.subr.bf16.mxu0 0
    %493 = vmatpush1.bf16.msra.mxu0 %v433
    %494 = vmatprep.subr.bf16.mxu0 0
    %495 = vmatpush1.bf16.msra.mxu0 %v434
    %496 = vmatprep.subr.bf16.mxu0 0
    %497 = vmatpush1.bf16.msra.mxu0 %v435
    %498 = vmatprep.subr.bf16.mxu0 0
    %499 = vmatpush1.bf16.msra.mxu0 %v436
    %500 = vmatprep.subr.bf16.mxu0 0
    %501 = vmatpush1.bf16.msra.mxu0 %v437
    %502 = vmatprep.subr.bf16.mxu0 0
    %503 = vmatpush1.bf16.msra.mxu0 %v438
    %504 = vmatprep.subr.bf16.mxu0 0
    %505 = vmatpush1.bf16.msra.mxu0 %v439
    %506 = vmatprep.subr.bf16.mxu0 0
    %507 = vmatpush1.bf16.msra.mxu0 %v440
    %508 = vmatprep.subr.bf16.mxu0 0
    %509 = vmatpush1.bf16.msra.mxu0 %v486
    %510 = vmatprep.subr.bf16.mxu0 0
    %511 = vmatpush1.bf16.msra.mxu0 0
    %512 = vmatprep.subr.bf16.mxu0 0
    %513 = vmatpush1.bf16.msra.mxu0 0
    %514 = vmatprep.subr.bf16.mxu0 0
    %515 = vmatpush1.bf16.msra.mxu0 0
    %516 = vmatprep.subr.bf16.mxu0 0
    %517 = vmatpush1.bf16.msra.mxu0 0
    %518 = vmatprep.subr.bf16.mxu0 0
    %519 = vmatpush1.bf16.msra.mxu0 0
    %520 = vmatprep.mubr.bf16.mxu0 %v480
    %521 = vmatmul.mubr.bf16.gmra.mrb[0].mxu0 %v472
    %v522 = vpop.f32.mrb[0].mxu0
    %v523 = vadd.f32 %v451, %v522
    %v524 = vpop.f32.mrb[0].mxu0
    %v525 = vpop.f32.mrb[0].mxu0
    %v526 = vadd.f32 %v456, %v525
    %v527 = vpop.f32.mrb[0].mxu0
    %528 = vmatprep.mubr.bf16.mxu0 %v483
    %529 = vmatmul.mubr.bf16.gmra.mrb[0].mxu0 %v474
    %v530 = vpop.f32.mrb[0].mxu0
    %v531 = vadd.f32 %v461, %v530
    %v532 = vpop.f32.mrb[0].mxu0
    %v533 = vpop.f32.mrb[0].mxu0
    %v534 = vpop.f32.mrb[0].mxu0
    %535 = vdwg.mxu0
    %v536 = vld [vmem:[#allocation11] sm:$0xf]
    %v537 = vld [vmem:[#allocation11 + $0x4] sm:$0xf]
    %v538 = vld [vmem:[#allocation11 + $0x8] sm:$0xf]
    %v539 = vpack.c.bf16 %v526, %v523
    %v540 = vpack.c.bf16 %v531, %v531
    %v541 = vld [vmem:[#allocation13] sm:$0xff]
    %v542 = vld [vmem:[#allocation13 + $0x8] sm:$0xff]
    %v543 = vld [vmem:[#allocation13 + $0x10] sm:$0xff]
    %545 = vset.pattern.permute.xlu0 0
    %546 = vperm.xlu0 %545, %v541
    %v547 = vpop.permute.xlu0 %546
    %550 = vset.pattern.permute.xlu0 0
    %551 = vperm.xlu0 %550, %v542
    %v552 = vpop.permute.xlu0 %551
    %555 = vset.pattern.permute.xlu0 0
    %556 = vperm.xlu0 %555, %v543
    %v557 = vpop.permute.xlu0 %556
    %v562 = vunpack.c.l.b16 %v536
    %v563 = vunpack.c.l.b16 %v537
    %v564 = vunpack.c.l.b16 %v538
    %v565 = vpack.c.b16 %v563, %v562
    %v566 = vpack.c.b16 %v564, %v564
    %vm567 = vcmask 195584
    %v569 = vsel %vm567, %v565, 0
    %v572 = vsel %vm567, %v566, 0
    %v575 = vsel %vm229, %v540, 0
    %577 = vmatprep.subr.bf16.mxu0 0
    %578 = vmatpush1.bf16.msra.mxu0 %v539
    %579 = vmatprep.subr.bf16.mxu0 0
    %580 = vmatpush1.bf16.msra.mxu0 %v575
    %581 = vmatprep.subr.bf16.mxu0 0
    %582 = vmatpush1.bf16.msra.mxu0 0
    %583 = vmatprep.subr.bf16.mxu0 0
    %584 = vmatpush1.bf16.msra.mxu0 0
    %585 = vmatprep.subr.bf16.mxu0 0
    %586 = vmatpush1.bf16.msra.mxu0 0
    %587 = vmatprep.subr.bf16.mxu0 0
    %588 = vmatpush1.bf16.msra.mxu0 0
    %589 = vmatprep.subr.bf16.mxu0 0
    %590 = vmatpush1.bf16.msra.mxu0 0
    %591 = vmatprep.subr.bf16.mxu0 0
    %592 = vmatpush1.bf16.msra.mxu0 0
    %593 = vmatprep.subr.bf16.mxu0 0
    %594 = vmatpush1.bf16.msra.mxu0 0
    %595 = vmatprep.subr.bf16.mxu0 0
    %596 = vmatpush1.bf16.msra.mxu0 0
    %597 = vmatprep.subr.bf16.mxu0 0
    %598 = vmatpush1.bf16.msra.mxu0 0
    %599 = vmatprep.subr.bf16.mxu0 0
    %600 = vmatpush1.bf16.msra.mxu0 0
    %601 = vmatprep.subr.bf16.mxu0 0
    %602 = vmatpush1.bf16.msra.mxu0 0
    %603 = vmatprep.subr.bf16.mxu0 0
    %604 = vmatpush1.bf16.msra.mxu0 0
    %605 = vmatprep.subr.bf16.mxu0 0
    %606 = vmatpush1.bf16.msra.mxu0 0
    %607 = vmatprep.subr.bf16.mxu0 0
    %608 = vmatpush1.bf16.msra.mxu0 0
    %609 = vmatprep.mubr.bf16.mxu0 0
    %610 = vmatmul.mubr.bf16.gmra.mrb[0].mxu0 %v569
    %v611 = vpop.f32.mrb[0].mxu0
    %v612 = vadd.f32 %v547, %v611
    %v613 = vpop.f32.mrb[0].mxu0
    %v614 = vpop.f32.mrb[0].mxu0
    %v615 = vadd.f32 %v552, %v614
    %v616 = vpop.f32.mrb[0].mxu0
    %617 = vmatprep.mubr.bf16.mxu0 0
    %618 = vmatmul.mubr.bf16.gmra.mrb[0].mxu0 %v572
    %v619 = vpop.f32.mrb[0].mxu0
    %v620 = vadd.f32 %v557, %v619
    %v621 = vpop.f32.mrb[0].mxu0
    %v622 = vpop.f32.mrb[0].mxu0
    %v623 = vpop.f32.mrb[0].mxu0
    %624 = vdwg.mxu0
    %v625 = vld [vmem:[#allocation17] sm:$0xf]
    %v626 = vld [vmem:[#allocation17 + $0x4] sm:$0xf]
    %v627 = vld [vmem:[#allocation17 + $0x8] sm:$0xf]
    %v628 = vld [vmem:[#allocation17 + $0xc] sm:$0xf]
    %v629 = vld [vmem:[#allocation17 + $0x10] sm:$0xf]
    %v630 = vld [vmem:[#allocation17 + $0x14] sm:$0xf]
    %v631 = vld [vmem:[#allocation19] sm:$0xff]
    %v632 = vld [vmem:[#allocation19 + $0x8] sm:$0xff]
    %v633 = vld [vmem:[#allocation19 + $0x10] sm:$0xff]
    %v634 = vld [vmem:[#allocation19 + $0x18] sm:$0xff]
    %v635 = vld [vmem:[#allocation19 + $0x20] sm:$0xff]
    %v636 = vld [vmem:[#allocation19 + $0x28] sm:$0xff]
    %638 = vset.pattern.permute.xlu0 0
    %639 = vperm.xlu0 %638, %v631
    %v640 = vpop.permute.xlu0 %639
    %643 = vset.pattern.permute.xlu0 0
    %644 = vperm.xlu0 %643, %v632
    %v645 = vpop.permute.xlu0 %644
    %648 = vset.pattern.permute.xlu0 0
    %649 = vperm.xlu0 %648, %v633
    %v650 = vpop.permute.xlu0 %649
    %653 = vset.pattern.permute.xlu0 0
    %654 = vperm.xlu0 %653, %v634
    %v655 = vpop.permute.xlu0 %654
    %658 = vset.pattern.permute.xlu0 0
    %659 = vperm.xlu0 %658, %v635
    %v660 = vpop.permute.xlu0 %659
    %663 = vset.pattern.permute.xlu0 0
    %664 = vperm.xlu0 %663, %v636
    %v665 = vpop.permute.xlu0 %664
    %v673 = vunpack.c.l.b16 %v625
    %v674 = vunpack.c.l.b16 %v626
    %v675 = vunpack.c.l.b16 %v627
    %v676 = vunpack.c.l.b16 %v628
    %v677 = vunpack.c.l.b16 %v629
    %v678 = vunpack.c.l.b16 %v630
    %v679 = vpack.c.b16 %v674, %v673
    %v680 = vpack.c.b16 %v676, %v675
    %v681 = vpack.c.b16 %v678, %v677
    %v683 = vsel %vm225, %v679, 0
    %v686 = vsel %vm225, %v680, 0
    %v689 = vsel %vm225, %v681, 0
    %691 = vmatprep.subr.bf16.mxu0 0
    %692 = vmatpush1.bf16.msra.mxu0 %v231
    %693 = vmatprep.subr.bf16.mxu0 0
    %694 = vmatpush1.bf16.msra.mxu0 0
    %695 = vmatprep.subr.bf16.mxu0 0
    %696 = vmatpush1.bf16.msra.mxu0 0
    %697 = vmatprep.subr.bf16.mxu0 0
    %698 = vmatpush1.bf16.msra.mxu0 0
    %699 = vmatprep.subr.bf16.mxu0 0
    %700 = vmatpush1.bf16.msra.mxu0 0
    %701 = vmatprep.subr.bf16.mxu0 0
    %702 = vmatpush1.bf16.msra.mxu0 0
    %703 = vmatprep.subr.bf16.mxu0 0
    %704 = vmatpush1.bf16.msra.mxu0 0
    %705 = vmatprep.subr.bf16.mxu0 0
    %706 = vmatpush1.bf16.msra.mxu0 0
    %707 = vmatprep.subr.bf16.mxu0 0
    %708 = vmatpush1.bf16.msra.mxu0 0
    %709 = vmatprep.subr.bf16.mxu0 0
    %710 = vmatpush1.bf16.msra.mxu0 0
    %711 = vmatprep.subr.bf16.mxu0 0
    %712 = vmatpush1.bf16.msra.mxu0 0
    %713 = vmatprep.subr.bf16.mxu0 0
    %714 = vmatpush1.bf16.msra.mxu0 0
    %715 = vmatprep.subr.bf16.mxu0 0
    %716 = vmatpush1.bf16.msra.mxu0 0
    %717 = vmatprep.subr.bf16.mxu0 0
    %718 = vmatpush1.bf16.msra.mxu0 0
    %719 = vmatprep.subr.bf16.mxu0 0
    %720 = vmatpush1.bf16.msra.mxu0 0
    %721 = vmatprep.subr.bf16.mxu0 0
    %722 = vmatpush1.bf16.msra.mxu0 0
    %723 = vmatprep.mubr.bf16.mxu0 0
    %724 = vmatmul.mubr.bf16.gmra.mrb[0].mxu0 %v683
    %v725 = vpop.f32.mrb[0].mxu0
    %v726 = vadd.f32 %v640, %v725
    %v727 = vpop.f32.mrb[0].mxu0
    %v728 = vpop.f32.mrb[0].mxu0
    %v729 = vadd.f32 %v645, %v728
    %v730 = vpop.f32.mrb[0].mxu0
    %731 = vmatprep.mubr.bf16.mxu0 0
    %732 = vmatmul.mubr.bf16.gmra.mrb[0].mxu0 %v686
    %v733 = vpop.f32.mrb[0].mxu0
    %v734 = vadd.f32 %v650, %v733
    %v735 = vpop.f32.mrb[0].mxu0
    %v736 = vpop.f32.mrb[0].mxu0
    %v737 = vadd.f32 %v655, %v736
    %v738 = vpop.f32.mrb[0].mxu0
    %739 = vmatprep.mubr.bf16.mxu0 0
    %740 = vmatmul.mubr.bf16.gmra.mrb[0].mxu0 %v689
    %v741 = vpop.f32.mrb[0].mxu0
    %v742 = vadd.f32 %v660, %v741
    %v743 = vpop.f32.mrb[0].mxu0
    %v744 = vpop.f32.mrb[0].mxu0
    %v745 = vadd.f32 %v665, %v744
    %v746 = vpop.f32.mrb[0].mxu0
    %747 = vdwg.mxu0
    %vm748 = vcmp.lt.s32.totalorder %v274, 48
    %v749 = vsel %vm748, 1, 0
    %v750 = vcvt.s32.f32 %v749
    %v751 = vld [vmem:[#allocation14] sm:$0xff]
    %v752 = vld [vmem:[#allocation14 + $0x8] sm:$0xff]
    %v753 = vld [vmem:[#allocation14 + $0x10] sm:$0xff]
    %v754 = vld [vmem:[#allocation14 + $0x18] sm:$0xff]
    %v755 = vld [vmem:[#allocation14 + $0x20] sm:$0xff]
    %v756 = vld [vmem:[#allocation14 + $0x28] sm:$0xff]
    %v757 = vld [vmem:[#allocation16] sm:$0xff]
    %v758 = vld [vmem:[#allocation16 + $0x8] sm:$0xff]
    %v759 = vld [vmem:[#allocation16 + $0x10] sm:$0xff]
    %v760 = vld [vmem:[#allocation16 + $0x18] sm:$0xff]
    %v761 = vld [vmem:[#allocation16 + $0x20] sm:$0xff]
    %v762 = vld [vmem:[#allocation16 + $0x28] sm:$0xff]
    %v763 = vmul.f32 %v523, %v750
    %v764 = vmul.f32 %v526, %v750
    %v765 = vmul.f32 %v531, %v750
    %v766 = vmul.f32 %v612, %v750
    %v767 = vmul.f32 %v615, %v750
    %v768 = vmul.f32 %v620, %v750
    %769 = vadd.xlane.f32.xlu0 %v763
    %v770 = vpop.xlane.xlu0 %769
    %771 = vadd.xlane.f32.xlu0 %v764
    %v772 = vpop.xlane.xlu0 %771
    %773 = vadd.xlane.f32.xlu0 %v765
    %v774 = vpop.xlane.xlu0 %773
    %775 = vadd.xlane.f32.xlu0 %v766
    %v776 = vpop.xlane.xlu0 %775
    %777 = vadd.xlane.f32.xlu0 %v767
    %v778 = vpop.xlane.xlu0 %777
    %779 = vadd.xlane.f32.xlu0 %v768
    %v780 = vpop.xlane.xlu0 %779
    %v781 = vmul.f32 %v770, 0.020833334
    %v782 = vmul.f32 %v772, 0.020833334
    %v783 = vmul.f32 %v774, 0.020833334
    %v784 = vmul.f32 %v776, 0.020833334
    %v785 = vmul.f32 %v778, 0.020833334
    %v786 = vmul.f32 %v780, 0.020833334
    %v787 = vsub.f32 %v523, %v781
    %v788 = vsub.f32 %v526, %v782
    %v789 = vsub.f32 %v531, %v783
    %v790 = vsub.f32 %v612, %v784
    %v791 = vsub.f32 %v615, %v785
    %v792 = vsub.f32 %v620, %v786
    %v793 = vmul.f32 %v787, %v750
    %v794 = vmul.f32 %v788, %v750
    %v795 = vmul.f32 %v789, %v750
    %v796 = vmul.f32 %v790, %v750
    %v797 = vmul.f32 %v791, %v750
    %v798 = vmul.f32 %v792, %v750
    %v799 = vmul.f32 %v793, %v793
    %v800 = vmul.f32 %v794, %v794
    %v801 = vmul.f32 %v795, %v795
    %v802 = vmul.f32 %v796, %v796
    %v803 = vmul.f32 %v797, %v797
    %v804 = vmul.f32 %v798, %v798
    %805 = vadd.xlane.f32.xlu0 %v799
    %v806 = vpop.xlane.xlu0 %805
    %807 = vadd.xlane.f32.xlu0 %v800
    %v808 = vpop.xlane.xlu0 %807
    %809 = vadd.xlane.f32.xlu0 %v801
    %v810 = vpop.xlane.xlu0 %809
    %811 = vadd.xlane.f32.xlu0 %v802
    %v812 = vpop.xlane.xlu0 %811
    %813 = vadd.xlane.f32.xlu0 %v803
    %v814 = vpop.xlane.xlu0 %813
    %815 = vadd.xlane.f32.xlu0 %v804
    %v816 = vpop.xlane.xlu0 %815
    %v817 = vmul.f32 %v806, 0.020833334
    %v818 = vmul.f32 %v808, 0.020833334
    %v819 = vmul.f32 %v810, 0.020833334
    %v820 = vmul.f32 %v812, 0.020833334
    %v821 = vmul.f32 %v814, 0.020833334
    %v822 = vmul.f32 %v816, 0.020833334
    %v823 = vadd.f32 %v817, 1e-05
    %v824 = vadd.f32 %v818, 1e-05
    %v825 = vadd.f32 %v819, 1e-05
    %v826 = vadd.f32 %v820, 1e-05
    %v827 = vadd.f32 %v821, 1e-05
    %v828 = vadd.f32 %v822, 1e-05
    %v829 = vrsqrt.pop %v823
    %v830 = vrsqrt.pop %v824
    %v831 = vrsqrt.pop %v825
    %v832 = vrsqrt.pop %v826
    %v833 = vrsqrt.pop %v827
    %v834 = vrsqrt.pop %v828
    %v835 = vmul.f32 %v751, %v829
    %v836 = vmul.f32 %v752, %v830
    %v837 = vmul.f32 %v753, %v831
    %v838 = vmul.f32 %v754, %v832
    %v839 = vmul.f32 %v755, %v833
    %v840 = vmul.f32 %v756, %v834
    %v841 = vmul.f32 %v781, %v835
    %v842 = vmul.f32 %v782, %v836
    %v843 = vmul.f32 %v783, %v837
    %v844 = vmul.f32 %v784, %v838
    %v845 = vmul.f32 %v785, %v839
    %v846 = vmul.f32 %v786, %v840
    %v847 = vsub.f32 %v757, %v841
    %v848 = vsub.f32 %v758, %v842
    %v849 = vsub.f32 %v759, %v843
    %v850 = vsub.f32 %v760, %v844
    %v851 = vsub.f32 %v761, %v845
    %v852 = vsub.f32 %v762, %v846
    %v853 = vld [vmem:[#allocation20] sm:$0xff]
    %v854 = vld [vmem:[#allocation20 + $0x8] sm:$0xff]
    %v855 = vld [vmem:[#allocation20 + $0x10] sm:$0xff]
    %v856 = vld [vmem:[#allocation20 + $0x18] sm:$0xff]
    %v857 = vld [vmem:[#allocation20 + $0x20] sm:$0xff]
    %v858 = vld [vmem:[#allocation20 + $0x28] sm:$0xff]
    %v859 = vld [vmem:[#allocation22] sm:$0xff]
    %v860 = vld [vmem:[#allocation22 + $0x8] sm:$0xff]
    %v861 = vld [vmem:[#allocation22 + $0x10] sm:$0xff]
    %v862 = vld [vmem:[#allocation22 + $0x18] sm:$0xff]
    %v863 = vld [vmem:[#allocation22 + $0x20] sm:$0xff]
    %v864 = vld [vmem:[#allocation22 + $0x28] sm:$0xff]
    %v865 = vmul.f32 %v726, %v750
    %v866 = vmul.f32 %v729, %v750
    %v867 = vmul.f32 %v734, %v750
    %v868 = vmul.f32 %v737, %v750
    %v869 = vmul.f32 %v742, %v750
    %v870 = vmul.f32 %v745, %v750
    %871 = vadd.xlane.f32.xlu0 %v865
    %v872 = vpop.xlane.xlu0 %871
    %873 = vadd.xlane.f32.xlu0 %v866
    %v874 = vpop.xlane.xlu0 %873
    %875 = vadd.xlane.f32.xlu0 %v867
    %v876 = vpop.xlane.xlu0 %875
    %877 = vadd.xlane.f32.xlu0 %v868
    %v878 = vpop.xlane.xlu0 %877
    %879 = vadd.xlane.f32.xlu0 %v869
    %v880 = vpop.xlane.xlu0 %879
    %881 = vadd.xlane.f32.xlu0 %v870
    %v882 = vpop.xlane.xlu0 %881
    %v883 = vmul.f32 %v872, 0.020833334
    %v884 = vmul.f32 %v874, 0.020833334
    %v885 = vmul.f32 %v876, 0.020833334
    %v886 = vmul.f32 %v878, 0.020833334
    %v887 = vmul.f32 %v880, 0.020833334
    %v888 = vmul.f32 %v882, 0.020833334
    %v889 = vsub.f32 %v726, %v883
    %v890 = vsub.f32 %v729, %v884
    %v891 = vsub.f32 %v734, %v885
    %v892 = vsub.f32 %v737, %v886
    %v893 = vsub.f32 %v742, %v887
    %v894 = vsub.f32 %v745, %v888
    %v895 = vmul.f32 %v889, %v750
    %v896 = vmul.f32 %v890, %v750
    %v897 = vmul.f32 %v891, %v750
    %v898 = vmul.f32 %v892, %v750
    %v899 = vmul.f32 %v893, %v750
    %v900 = vmul.f32 %v894, %v750
    %v901 = vmul.f32 %v895, %v895
    %v902 = vmul.f32 %v896, %v896
    %v903 = vmul.f32 %v897, %v897
    %v904 = vmul.f32 %v898, %v898
    %v905 = vmul.f32 %v899, %v899
    %v906 = vmul.f32 %v900, %v900
    %907 = vadd.xlane.f32.xlu0 %v901
    %v908 = vpop.xlane.xlu0 %907
    %909 = vadd.xlane.f32.xlu0 %v902
    %v910 = vpop.xlane.xlu0 %909
    %911 = vadd.xlane.f32.xlu0 %v903
    %v912 = vpop.xlane.xlu0 %911
    %913 = vadd.xlane.f32.xlu0 %v904
    %v914 = vpop.xlane.xlu0 %913
    %915 = vadd.xlane.f32.xlu0 %v905
    %v916 = vpop.xlane.xlu0 %915
    %917 = vadd.xlane.f32.xlu0 %v906
    %v918 = vpop.xlane.xlu0 %917
    %v919 = vmul.f32 %v908, 0.020833334
    %v920 = vmul.f32 %v910, 0.020833334
    %v921 = vmul.f32 %v912, 0.020833334
    %v922 = vmul.f32 %v914, 0.020833334
    %v923 = vmul.f32 %v916, 0.020833334
    %v924 = vmul.f32 %v918, 0.020833334
    %v925 = vadd.f32 %v919, 1e-05
    %v926 = vadd.f32 %v920, 1e-05
    %v927 = vadd.f32 %v921, 1e-05
    %v928 = vadd.f32 %v922, 1e-05
    %v929 = vadd.f32 %v923, 1e-05
    %v930 = vadd.f32 %v924, 1e-05
    %v931 = vrsqrt.pop %v925
    %v932 = vrsqrt.pop %v926
    %v933 = vrsqrt.pop %v927
    %v934 = vrsqrt.pop %v928
    %v935 = vrsqrt.pop %v929
    %v936 = vrsqrt.pop %v930
    %v937 = vmul.f32 %v853, %v931
    %v938 = vmul.f32 %v854, %v932
    %v939 = vmul.f32 %v855, %v933
    %v940 = vmul.f32 %v856, %v934
    %v941 = vmul.f32 %v857, %v935
    %v942 = vmul.f32 %v858, %v936
    %v943 = vmul.f32 %v883, %v937
    %v944 = vmul.f32 %v884, %v938
    %v945 = vmul.f32 %v885, %v939
    %v946 = vmul.f32 %v886, %v940
    %v947 = vmul.f32 %v887, %v941
    %v948 = vmul.f32 %v888, %v942
    %v949 = vsub.f32 %v859, %v943
    %v950 = vsub.f32 %v860, %v944
    %v951 = vsub.f32 %v861, %v945
    %v952 = vsub.f32 %v862, %v946
    %v953 = vsub.f32 %v863, %v947
    %v954 = vsub.f32 %v864, %v948
    %956 = vset.pattern.permute.xlu0 0
    %957 = vperm.xlu0 %956, %v835
    %v958 = vpop.permute.xlu0 %957
    %961 = vset.pattern.permute.xlu0 0
    %962 = vperm.xlu0 %961, %v836
    %v963 = vpop.permute.xlu0 %962
    %966 = vset.pattern.permute.xlu0 0
    %967 = vperm.xlu0 %966, %v837
    %v968 = vpop.permute.xlu0 %967
    %971 = vset.pattern.permute.xlu0 0
    %972 = vperm.xlu0 %971, %v838
    %v973 = vpop.permute.xlu0 %972
    %976 = vset.pattern.permute.xlu0 0
    %977 = vperm.xlu0 %976, %v839
    %v978 = vpop.permute.xlu0 %977
    %981 = vset.pattern.permute.xlu0 0
    %982 = vperm.xlu0 %981, %v840
    %v983 = vpop.permute.xlu0 %982
    %v985 = vmul.f32 %v523, %v958
    %v986 = vmul.f32 %v526, %v963
    %v987 = vmul.f32 %v531, %v968
    %v988 = vmul.f32 %v612, %v973
    %v989 = vmul.f32 %v615, %v978
    %v990 = vmul.f32 %v620, %v983
    %992 = vset.pattern.permute.xlu0 0
    %993 = vperm.xlu0 %992, %v847
    %v994 = vpop.permute.xlu0 %993
    %997 = vset.pattern.permute.xlu0 0
    %998 = vperm.xlu0 %997, %v848
    %v999 = vpop.permute.xlu0 %998
    %1002 = vset.pattern.permute.xlu0 0
    %1003 = vperm.xlu0 %1002, %v849
    %v1004 = vpop.permute.xlu0 %1003
    %1007 = vset.pattern.permute.xlu0 0
    %1008 = vperm.xlu0 %1007, %v850
    %v1009 = vpop.permute.xlu0 %1008
    %1012 = vset.pattern.permute.xlu0 0
    %1013 = vperm.xlu0 %1012, %v851
    %v1014 = vpop.permute.xlu0 %1013
    %1017 = vset.pattern.permute.xlu0 0
    %1018 = vperm.xlu0 %1017, %v852
    %v1019 = vpop.permute.xlu0 %1018
    %v1021 = vadd.f32 %v985, %v994
    %v1022 = vadd.f32 %v986, %v999
    %v1023 = vadd.f32 %v987, %v1004
    %v1024 = vadd.f32 %v988, %v1009
    %v1025 = vadd.f32 %v989, %v1014
    %v1026 = vadd.f32 %v990, %v1019
    %v1027 = vmax.f32 %v1021, 0.0
    %v1028 = vmax.f32 %v1022, 0.0
    %v1029 = vmax.f32 %v1023, 0.0
    %v1030 = vmax.f32 %v1024, 0.0
    %v1031 = vmax.f32 %v1025, 0.0
    %v1032 = vmax.f32 %v1026, 0.0
    %1034 = vset.pattern.permute.xlu0 0
    %1035 = vperm.xlu0 %1034, %v937
    %v1036 = vpop.permute.xlu0 %1035
    %1039 = vset.pattern.permute.xlu0 0
    %1040 = vperm.xlu0 %1039, %v938
    %v1041 = vpop.permute.xlu0 %1040
    %1044 = vset.pattern.permute.xlu0 0
    %1045 = vperm.xlu0 %1044, %v939
    %v1046 = vpop.permute.xlu0 %1045
    %1049 = vset.pattern.permute.xlu0 0
    %1050 = vperm.xlu0 %1049, %v940
    %v1051 = vpop.permute.xlu0 %1050
    %1054 = vset.pattern.permute.xlu0 0
    %1055 = vperm.xlu0 %1054, %v941
    %v1056 = vpop.permute.xlu0 %1055
    %1059 = vset.pattern.permute.xlu0 0
    %1060 = vperm.xlu0 %1059, %v942
    %v1061 = vpop.permute.xlu0 %1060
    %v1063 = vmul.f32 %v726, %v1036
    %v1064 = vmul.f32 %v729, %v1041
    %v1065 = vmul.f32 %v734, %v1046
    %v1066 = vmul.f32 %v737, %v1051
    %v1067 = vmul.f32 %v742, %v1056
    %v1068 = vmul.f32 %v745, %v1061
    %v1069 = vadd.f32 %v1027, %v1063
    %v1070 = vadd.f32 %v1028, %v1064
    %v1071 = vadd.f32 %v1029, %v1065
    %v1072 = vadd.f32 %v1030, %v1066
    %v1073 = vadd.f32 %v1031, %v1067
    %v1074 = vadd.f32 %v1032, %v1068
    %1076 = vset.pattern.permute.xlu0 0
    %1077 = vperm.xlu0 %1076, %v949
    %v1078 = vpop.permute.xlu0 %1077
    %1081 = vset.pattern.permute.xlu0 0
    %1082 = vperm.xlu0 %1081, %v950
    %v1083 = vpop.permute.xlu0 %1082
    %1086 = vset.pattern.permute.xlu0 0
    %1087 = vperm.xlu0 %1086, %v951
    %v1088 = vpop.permute.xlu0 %1087
    %1091 = vset.pattern.permute.xlu0 0
    %1092 = vperm.xlu0 %1091, %v952
    %v1093 = vpop.permute.xlu0 %1092
    %1096 = vset.pattern.permute.xlu0 0
    %1097 = vperm.xlu0 %1096, %v953
    %v1098 = vpop.permute.xlu0 %1097
    %1101 = vset.pattern.permute.xlu0 0
    %1102 = vperm.xlu0 %1101, %v954
    %v1103 = vpop.permute.xlu0 %1102
    %v1105 = vadd.f32 %v1069, %v1078
    %v1106 = vadd.f32 %v1070, %v1083
    %v1107 = vadd.f32 %v1071, %v1088
    %v1108 = vadd.f32 %v1072, %v1093
    %v1109 = vadd.f32 %v1073, %v1098
    %v1110 = vadd.f32 %v1074, %v1103
    %1111 = vst [vmem:[#allocation23] sm:$0xff] %v1105
    %1112 = vst [vmem:[#allocation23 + $0x8] sm:$0xff] %v1106
    %1113 = vst [vmem:[#allocation23 + $0x10] sm:$0xff] %v1107
    %1114 = vst [vmem:[#allocation23 + $0x18] sm:$0xff] %v1108
    %1115 = vst [vmem:[#allocation23 + $0x20] sm:$0xff] %v1109
    %1116 = vst [vmem:[#allocation23 + $0x28] sm:$0xff] %v1110
    // Predicated region
    $region106: #{msd_block.1} parent=1 // pred_check
      _
    $region107: #{msd_block.1} parent=1 // pred_check_branch
      %1118 = sbr.rel (0) target = $region109
    $region108: #{msd_block.1} parent=1 // pred_region
      %s1120 = ssub.s32 768, 768
      %1121 = vsyncadd [#allocation4], %s1120
      %s1122 = sshll.u32 [#allocation23], 4
      %s1123 = int_to_ptr.vmem [resolvable:$true] %s1122
      %1128 = dma.vmem_to_hbm [thread:$0]  %s1123, 768, %s13, [#allocation4], 128, 128, 8
    $region109: #{msd_block.1} parent=1 // pred_fallthru
      _
    // Predicated region
    $region110: #{msd_block.1} parent=1 // pred_check
      _
    $region111: #{msd_block.1} parent=1 // pred_check_branch
      %1130 = sbr.rel (0) target = $region113
    $region112: #{msd_block.1} parent=1 // pred_region
      %1131 = dma.done [#allocation4], 768
    $region113: #{msd_block.1} parent=1 // pred_fallthru
      _
    %1132 = vsyncpa [#allocation3], 1
    %1133 = vsyncpa [#allocation6], 1
    %1134 = vsyncpa [#allocation9], 1
    %1135 = vsyncpa [#allocation12], 1
    %1136 = vsyncpa [#allocation15], 1
    %1137 = vsyncpa [#allocation18], 1
    %1138 = vsyncpa [#allocation21], 1
    %1139 = vsyncpa [#allocation4], 1

</llo_original>
